<compile_context>
chip_gen: v6e
topology: v6e:2x2x1
jax: 0.10.0
libtpu: 0.0.40
codegen_flags: <defaults>
</compile_context>

<pallas_src>
import math

import jax
import jax.numpy as jnp
from jax import lax
from jax.experimental import pallas as pl
from jax.experimental.pallas import tpu as pltpu

EPS = 1e-5  # PyTorch BatchNorm2d default eps


# ----------------------------------------------------------------------------
# Fused Down_Sample kernel
# ----------------------------------------------------------------------------
def _down_sample_kernel(x_ref, w1_ref, w2_ref, s1_ref, b1_ref, s2_ref, b2_ref,
                        o_ref, slab_ref):
    """conv3x3(s1,p1)+bias+BN1+ReLU+conv1x1(s2)+BN2, fused per batch tile.

    x_ref    : (Bt, 2, 2, H2+1, W2+1, Cin) bf16  row/col parity planes of the
               pad-1 input (plane[pr][pc][r,c] = x_pad[2r+pr, 2c+pc])
    w1_ref   : (9*Cin, C) bf16   conv1 weight, K ordered (di, dj, cin)
    w2_ref   : (C, C)     bf16   conv2 1x1 weight (in, out)
    s*/b*    : (1, C) f32        folded BN scale / bias
    o_ref    : (Bt, H2*W2, C) f32
    slab_ref : (Bt, H2, W2, 9*Cin) bf16 VMEM scratch (even-position im2col)
    """
    bt, _, _, h2p1, w2p1, cin = x_ref.shape
    h2, w2 = h2p1 - 1, w2p1 - 1
    m = bt * h2 * w2

    # conv1 is only needed at the even spatial positions (the only positions
    # the stride-2 1x1 conv2 consumes).  Build the im2col slab with 9 static
    # tap slices; each tap is a contiguous window of one parity plane.
    for di in range(3):
        for dj in range(3):
            pr, pc = di % 2, dj % 2
            ro, co = di // 2, dj // 2
            tap = di * 3 + dj
            win = x_ref[:, pr, pc, ro:ro + h2, co:co + w2, :]   # (bt,h2,w2,cin)
            slab_ref[:, :, :, tap * cin:(tap + 1) * cin] = win

    # Single K = 9*Cin matmul (one MXU push/drain instead of 9 small ones).
    patches = slab_ref[...].reshape(m, 9 * cin)
    acc = jnp.dot(patches, w1_ref[...], preferred_element_type=jnp.float32)

    # conv1 bias + BN1 folded into one affine, then ReLU (f32 epilogue).
    y = jnp.maximum(acc * s1_ref[...] + b1_ref[...], 0.0)

    # conv2 (1x1; stride handled by even-position sampling) + BN2.
    out = jnp.dot(y.astype(jnp.bfloat16), w2_ref[...],
                  preferred_element_type=jnp.float32)
    out = out * s2_ref[...] + b2_ref[...]
    o_ref[...] = out.reshape(o_ref.shape).astype(o_ref.dtype)


# ----------------------------------------------------------------------------
# Wrapper
# ----------------------------------------------------------------------------
def fold_bn(bn):
    scale = bn["gamma"] * lax.rsqrt(bn["var"] + EPS)
    bias = bn["beta"] - bn["mean"] * scale
    return scale, bias


def down_sample_forward(params, x_nchw, b_tile=None):
    """NCHW float32 in -> NCHW float32 out (matches the PyTorch module)."""
    x = jnp.transpose(x_nchw, (0, 2, 3, 1)).astype(jnp.float32)   # NHWC
    n, h, w, cin = x.shape
    c = params["conv1_w"].shape[-1]
    h2, w2 = (h + 1) // 2, (w + 1) // 2

    # Batch tile: fold batch into the matmul M dimension, but keep the grid at
    # >= 2 steps when N >= 2 so both TensorCores on v7x parts get work.
    if b_tile is None:
        b_tile = max(1, 512 // (h2 * w2))          # target M ~= 512 rows/step
        if n >= 2:
            b_tile = min(b_tile, max(1, n // 2))
        b_tile = min(b_tile, n)
    n_blocks = pl.cdiv(n, b_tile)
    n_pad = n_blocks * b_tile

    # ONE fused layout pass (read x once, write once): batch pad, conv pad-1
    # on top/left + zero fill bottom/right so every parity plane is exactly
    # (h2+1, w2+1), cast to bf16, and rearrange into row/col parity planes.
    hp, wp = 2 * (h2 + 1), 2 * (w2 + 1)
    xp = jnp.pad(x, ((0, n_pad - n), (1, hp - h - 1), (1, wp - w - 1), (0, 0)))
    xp = xp.astype(jnp.bfloat16)
    xq = xp.reshape(n_pad, h2 + 1, 2, w2 + 1, 2, cin)
    xq = jnp.transpose(xq, (0, 2, 4, 1, 3, 5))     # (n,2,2,h2+1,w2+1,cin)

    s1, b1 = fold_bn(params["bn1"])
    b1 = params["conv1_b"] * s1 + b1               # fold conv1 bias through BN1
    s2, b2 = fold_bn(params["bn2"])

    w1_mat = params["conv1_w"].reshape(9 * cin, c).astype(jnp.bfloat16)
    w2_mat = params["conv2_w"].reshape(c, c).astype(jnp.bfloat16)

    x_spec = pl.BlockSpec((b_tile, 2, 2, h2 + 1, w2 + 1, cin),
                          lambda i: (i, 0, 0, 0, 0, 0))

    def _full(shape):
        zeros = (0,) * len(shape)
        return pl.BlockSpec(shape, lambda i: zeros)

    out = pl.pallas_call(
        _down_sample_kernel,
        out_shape=jax.ShapeDtypeStruct((n_pad, h2 * w2, c), jnp.float32),
        grid_spec=pltpu.PrefetchScalarGridSpec(
            num_scalar_prefetch=0,
            grid=(n_blocks,),
            in_specs=[x_spec,
                      _full((9 * cin, c)),
                      _full((c, c)),
                      _full((1, c)), _full((1, c)),
                      _full((1, c)), _full((1, c))],
            out_specs=pl.BlockSpec((b_tile, h2 * w2, c), lambda i: (i, 0, 0)),
            scratch_shapes=[pltpu.VMEM((b_tile, h2, w2, 9 * cin),
                                       jnp.bfloat16)]),
        compiler_params=pltpu.CompilerParams(
            dimension_semantics=("parallel",),
            vmem_limit_bytes=32 * 1024 * 1024),
    )(xq, w1_mat, w2_mat,
      s1.reshape(1, c), b1.reshape(1, c),
      s2.reshape(1, c), b2.reshape(1, c))

    out = out[:n].reshape(n, h2, w2, c)
    return jnp.transpose(out, (0, 3, 1, 2))        # back to NCHW


# ----------------------------------------------------------------------------
# Pure-JAX reference (mirrors the PyTorch forward, f32 throughout)
# ----------------------------------------------------------------------------
def down_sample_reference(params, x_nchw):
    x = jnp.transpose(x_nchw, (0, 2, 3, 1)).astype(jnp.float32)
    dn = ("NHWC", "HWIO", "NHWC")
    y = lax.conv_general_dilated(x, params["conv1_w"], (1, 1),
                                 ((1, 1), (1, 1)), dimension_numbers=dn)
    y = y + params["conv1_b"]
    s1, b1 = fold_bn(params["bn1"])
    y = jnp.maximum(y * s1 + b1, 0.0)
    y = lax.conv_general_dilated(y, params["conv2_w"], (2, 2), "VALID",
                                 dimension_numbers=dn)
    s2, b2 = fold_bn(params["bn2"])
    y = y * s2 + b2
    return jnp.transpose(y, (0, 3, 1, 2))


# ----------------------------------------------------------------------------
# Deterministic parameter initialization
# ----------------------------------------------------------------------------
def init_params(key, in_channels, out_channels):
    keys = jax.random.split(key, 5)

    def bn_params(cc, k):
        kg, kb, km, kv = jax.random.split(k, 4)
        return dict(gamma=jax.random.uniform(kg, (cc,), jnp.float32, 0.5, 1.5),
                    beta=0.1 * jax.random.normal(kb, (cc,), jnp.float32),
                    mean=0.1 * jax.random.normal(km, (cc,), jnp.float32),
                    var=jax.random.uniform(kv, (cc,), jnp.float32, 0.5, 1.5))

    std1 = math.sqrt(2.0 / (out_channels * 9))        # kaiming fan_out
    conv1_w = std1 * jax.random.normal(
        keys[0], (3, 3, in_channels, out_channels), jnp.float32)
    bound1 = 1.0 / math.sqrt(in_channels * 9)
    conv1_b = jax.random.uniform(keys[1], (out_channels,), jnp.float32,
                                 -bound1, bound1)
    std2 = math.sqrt(2.0 / out_channels)
    conv2_w = std2 * jax.random.normal(
        keys[2], (1, 1, out_channels, out_channels), jnp.float32)
    return dict(conv1_w=conv1_w, conv1_b=conv1_b, conv2_w=conv2_w,
                bn1=bn_params(out_channels, keys[3]),
                bn2=bn_params(out_channels, keys[4]))


# ----------------------------------------------------------------------------
if __name__ == "__main__":
    key = jax.random.PRNGKey(0)
    kx, kx2, kp = jax.random.split(key, 3)

    N, C_IN, C_OUT = 2, 16, 32
    params = init_params(kp, C_IN, C_OUT)
    fwd = jax.jit(down_sample_forward)

    # Even spatial size.
    x = jax.random.normal(kx, (N, C_IN, 16, 16), jnp.float32)   # NCHW
    out = jax.block_until_ready(fwd(params, x))
    assert out.shape == (N, C_OUT, 8, 8), out.shape
    assert bool(jnp.all(jnp.isfinite(out)))
    ref = down_sample_reference(params, x)
    err = float(jnp.max(jnp.abs(out - ref)))
    assert bool(jnp.allclose(out, ref, rtol=5e-2, atol=5e-2)), err

    # Odd spatial size (exercises the bottom/right zero-pad geometry).
    x2 = jax.random.normal(kx2, (N, C_IN, 15, 15), jnp.float32)
    out2 = jax.block_until_ready(fwd(params, x2))
    assert out2.shape == (N, C_OUT, 8, 8), out2.shape
    assert bool(jnp.all(jnp.isfinite(out2)))
    ref2 = down_sample_reference(params, x2)
    err2 = float(jnp.max(jnp.abs(out2 - ref2)))
    assert bool(jnp.allclose(out2, ref2, rtol=5e-2, atol=5e-2)), err2

    print("KERNEL_OK")
</pallas_src>

<mosaic_0001>
module attributes {stable_mosaic.version = 11 : i64} {
  func.func @_down_sample_kernel(%arg0: i32, %arg1: memref<1x2x2x9x9x16xbf16, #tpu.memory_space<vmem>>, %arg2: memref<144x32xbf16, #tpu.memory_space<vmem>>, %arg3: memref<32x32xbf16, #tpu.memory_space<vmem>>, %arg4: memref<1x32xf32, #tpu.memory_space<vmem>>, %arg5: memref<1x32xf32, #tpu.memory_space<vmem>>, %arg6: memref<1x32xf32, #tpu.memory_space<vmem>>, %arg7: memref<1x32xf32, #tpu.memory_space<vmem>>, %arg8: memref<1x64x32xf32, #tpu.memory_space<vmem>>, %arg9: memref<1x8x8x144xbf16, #tpu.memory_space<vmem>>) attributes {dimension_semantics = [#tpu.dimension_semantics<parallel>], iteration_bounds = array<i64: 2>, scalar_prefetch = 0 : i64, scratch_operands = 1 : i64, tpu.core_type = #tpu.core_type<tc>, window_params = [{transform_indices = @transform_0, window_bounds = array<i64: 1, 2, 2, 9, 9, 16>}, {pipeline_mode = #tpu.pipeline_mode<synchronous>, transform_indices = @transform_1, window_bounds = array<i64: 144, 32>}, {pipeline_mode = #tpu.pipeline_mode<synchronous>, transform_indices = @transform_2, window_bounds = array<i64: 32, 32>}, {pipeline_mode = #tpu.pipeline_mode<synchronous>, transform_indices = @transform_3, window_bounds = array<i64: 1, 32>}, {pipeline_mode = #tpu.pipeline_mode<synchronous>, transform_indices = @transform_4, window_bounds = array<i64: 1, 32>}, {pipeline_mode = #tpu.pipeline_mode<synchronous>, transform_indices = @transform_5, window_bounds = array<i64: 1, 32>}, {pipeline_mode = #tpu.pipeline_mode<synchronous>, transform_indices = @transform_6, window_bounds = array<i64: 1, 32>}, {transform_indices = @transform_7, window_bounds = array<i64: 1, 64, 32>}]} {
    %c0 = arith.constant 0 : index
    %c0_0 = arith.constant 0 : index
    %c0_1 = arith.constant 0 : index
    %c0_2 = arith.constant 0 : index
    %c0_3 = arith.constant 0 : index
    %c0_4 = arith.constant 0 : index
    %0 = vector.load %arg1[%c0, %c0_0, %c0_1, %c0_2, %c0_3, %c0_4] : memref<1x2x2x9x9x16xbf16, #tpu.memory_space<vmem>>, vector<1x1x1x8x8x16xbf16>
    %1 = vector.shape_cast %0 : vector<1x1x1x8x8x16xbf16> to vector<1x8x8x16xbf16>
    %c0_5 = arith.constant 0 : index
    %c0_6 = arith.constant 0 : index
    %c0_7 = arith.constant 0 : index
    %c0_8 = arith.constant 0 : index
    %2 = vector.load %arg9[%c0_5, %c0_6, %c0_7, %c0_8] : memref<1x8x8x144xbf16, #tpu.memory_space<vmem>>, vector<1x8x8x16xbf16>
    tpu.vector_store %arg9[%c0_5, %c0_6, %c0_7, %c0_8], %1 {strides = array<i32>} : memref<1x8x8x144xbf16, #tpu.memory_space<vmem>>, vector<1x8x8x16xbf16>,
    %c0_9 = arith.constant 0 : index
    %c0_10 = arith.constant 0 : index
    %c1 = arith.constant 1 : index
    %c0_11 = arith.constant 0 : index
    %c0_12 = arith.constant 0 : index
    %c0_13 = arith.constant 0 : index
    %3 = vector.load %arg1[%c0_9, %c0_10, %c1, %c0_11, %c0_12, %c0_13] : memref<1x2x2x9x9x16xbf16, #tpu.memory_space<vmem>>, vector<1x1x1x8x8x16xbf16>
    %4 = vector.shape_cast %3 : vector<1x1x1x8x8x16xbf16> to vector<1x8x8x16xbf16>
    %c0_14 = arith.constant 0 : index
    %c0_15 = arith.constant 0 : index
    %c0_16 = arith.constant 0 : index
    %c16 = arith.constant 16 : index
    %5 = vector.load %arg9[%c0_14, %c0_15, %c0_16, %c16] : memref<1x8x8x144xbf16, #tpu.memory_space<vmem>>, vector<1x8x8x16xbf16>
    tpu.vector_store %arg9[%c0_14, %c0_15, %c0_16, %c16], %4 {strides = array<i32>} : memref<1x8x8x144xbf16, #tpu.memory_space<vmem>>, vector<1x8x8x16xbf16>,
    %c0_17 = arith.constant 0 : index
    %c0_18 = arith.constant 0 : index
    %c0_19 = arith.constant 0 : index
    %c0_20 = arith.constant 0 : index
    %c1_21 = arith.constant 1 : index
    %c0_22 = arith.constant 0 : index
    %6 = vector.load %arg1[%c0_17, %c0_18, %c0_19, %c0_20, %c1_21, %c0_22] : memref<1x2x2x9x9x16xbf16, #tpu.memory_space<vmem>>, vector<1x1x1x8x8x16xbf16>
    %7 = vector.shape_cast %6 : vector<1x1x1x8x8x16xbf16> to vector<1x8x8x16xbf16>
    %c0_23 = arith.constant 0 : index
    %c0_24 = arith.constant 0 : index
    %c0_25 = arith.constant 0 : index
    %c32 = arith.constant 32 : index
    %8 = vector.load %arg9[%c0_23, %c0_24, %c0_25, %c32] : memref<1x8x8x144xbf16, #tpu.memory_space<vmem>>, vector<1x8x8x16xbf16>
    tpu.vector_store %arg9[%c0_23, %c0_24, %c0_25, %c32], %7 {strides = array<i32>} : memref<1x8x8x144xbf16, #tpu.memory_space<vmem>>, vector<1x8x8x16xbf16>,
    %c0_26 = arith.constant 0 : index
    %c1_27 = arith.constant 1 : index
    %c0_28 = arith.constant 0 : index
    %c0_29 = arith.constant 0 : index
    %c0_30 = arith.constant 0 : index
    %c0_31 = arith.constant 0 : index
    %9 = vector.load %arg1[%c0_26, %c1_27, %c0_28, %c0_29, %c0_30, %c0_31] : memref<1x2x2x9x9x16xbf16, #tpu.memory_space<vmem>>, vector<1x1x1x8x8x16xbf16>
    %10 = vector.shape_cast %9 : vector<1x1x1x8x8x16xbf16> to vector<1x8x8x16xbf16>
    %c0_32 = arith.constant 0 : index
    %c0_33 = arith.constant 0 : index
    %c0_34 = arith.constant 0 : index
    %c48 = arith.constant 48 : index
    %11 = vector.load %arg9[%c0_32, %c0_33, %c0_34, %c48] : memref<1x8x8x144xbf16, #tpu.memory_space<vmem>>, vector<1x8x8x16xbf16>
    tpu.vector_store %arg9[%c0_32, %c0_33, %c0_34, %c48], %10 {strides = array<i32>} : memref<1x8x8x144xbf16, #tpu.memory_space<vmem>>, vector<1x8x8x16xbf16>,
    %c0_35 = arith.constant 0 : index
    %c1_36 = arith.constant 1 : index
    %c1_37 = arith.constant 1 : index
    %c0_38 = arith.constant 0 : index
    %c0_39 = arith.constant 0 : index
    %c0_40 = arith.constant 0 : index
    %12 = vector.load %arg1[%c0_35, %c1_36, %c1_37, %c0_38, %c0_39, %c0_40] : memref<1x2x2x9x9x16xbf16, #tpu.memory_space<vmem>>, vector<1x1x1x8x8x16xbf16>
    %13 = vector.shape_cast %12 : vector<1x1x1x8x8x16xbf16> to vector<1x8x8x16xbf16>
    %c0_41 = arith.constant 0 : index
    %c0_42 = arith.constant 0 : index
    %c0_43 = arith.constant 0 : index
    %c64 = arith.constant 64 : index
    %14 = vector.load %arg9[%c0_41, %c0_42, %c0_43, %c64] : memref<1x8x8x144xbf16, #tpu.memory_space<vmem>>, vector<1x8x8x16xbf16>
    tpu.vector_store %arg9[%c0_41, %c0_42, %c0_43, %c64], %13 {strides = array<i32>} : memref<1x8x8x144xbf16, #tpu.memory_space<vmem>>, vector<1x8x8x16xbf16>,
    %c0_44 = arith.constant 0 : index
    %c1_45 = arith.constant 1 : index
    %c0_46 = arith.constant 0 : index
    %c0_47 = arith.constant 0 : index
    %c1_48 = arith.constant 1 : index
    %c0_49 = arith.constant 0 : index
    %15 = vector.load %arg1[%c0_44, %c1_45, %c0_46, %c0_47, %c1_48, %c0_49] : memref<1x2x2x9x9x16xbf16, #tpu.memory_space<vmem>>, vector<1x1x1x8x8x16xbf16>
    %16 = vector.shape_cast %15 : vector<1x1x1x8x8x16xbf16> to vector<1x8x8x16xbf16>
    %c0_50 = arith.constant 0 : index
    %c0_51 = arith.constant 0 : index
    %c0_52 = arith.constant 0 : index
    %c80 = arith.constant 80 : index
    %17 = vector.load %arg9[%c0_50, %c0_51, %c0_52, %c80] : memref<1x8x8x144xbf16, #tpu.memory_space<vmem>>, vector<1x8x8x16xbf16>
    tpu.vector_store %arg9[%c0_50, %c0_51, %c0_52, %c80], %16 {strides = array<i32>} : memref<1x8x8x144xbf16, #tpu.memory_space<vmem>>, vector<1x8x8x16xbf16>,
    %c0_53 = arith.constant 0 : index
    %c0_54 = arith.constant 0 : index
    %c0_55 = arith.constant 0 : index
    %c1_56 = arith.constant 1 : index
    %c0_57 = arith.constant 0 : index
    %c0_58 = arith.constant 0 : index
    %18 = vector.load %arg1[%c0_53, %c0_54, %c0_55, %c1_56, %c0_57, %c0_58] : memref<1x2x2x9x9x16xbf16, #tpu.memory_space<vmem>>, vector<1x1x1x8x8x16xbf16>
    %19 = vector.shape_cast %18 : vector<1x1x1x8x8x16xbf16> to vector<1x8x8x16xbf16>
    %c0_59 = arith.constant 0 : index
    %c0_60 = arith.constant 0 : index
    %c0_61 = arith.constant 0 : index
    %c96 = arith.constant 96 : index
    %20 = vector.load %arg9[%c0_59, %c0_60, %c0_61, %c96] : memref<1x8x8x144xbf16, #tpu.memory_space<vmem>>, vector<1x8x8x16xbf16>
    tpu.vector_store %arg9[%c0_59, %c0_60, %c0_61, %c96], %19 {strides = array<i32>} : memref<1x8x8x144xbf16, #tpu.memory_space<vmem>>, vector<1x8x8x16xbf16>,
    %c0_62 = arith.constant 0 : index
    %c0_63 = arith.constant 0 : index
    %c1_64 = arith.constant 1 : index
    %c1_65 = arith.constant 1 : index
    %c0_66 = arith.constant 0 : index
    %c0_67 = arith.constant 0 : index
    %21 = vector.load %arg1[%c0_62, %c0_63, %c1_64, %c1_65, %c0_66, %c0_67] : memref<1x2x2x9x9x16xbf16, #tpu.memory_space<vmem>>, vector<1x1x1x8x8x16xbf16>
    %22 = vector.shape_cast %21 : vector<1x1x1x8x8x16xbf16> to vector<1x8x8x16xbf16>
    %c0_68 = arith.constant 0 : index
    %c0_69 = arith.constant 0 : index
    %c0_70 = arith.constant 0 : index
    %c112 = arith.constant 112 : index
    %23 = vector.load %arg9[%c0_68, %c0_69, %c0_70, %c112] : memref<1x8x8x144xbf16, #tpu.memory_space<vmem>>, vector<1x8x8x16xbf16>
    tpu.vector_store %arg9[%c0_68, %c0_69, %c0_70, %c112], %22 {strides = array<i32>} : memref<1x8x8x144xbf16, #tpu.memory_space<vmem>>, vector<1x8x8x16xbf16>,
    %c0_71 = arith.constant 0 : index
    %c0_72 = arith.constant 0 : index
    %c0_73 = arith.constant 0 : index
    %c1_74 = arith.constant 1 : index
    %c1_75 = arith.constant 1 : index
    %c0_76 = arith.constant 0 : index
    %24 = vector.load %arg1[%c0_71, %c0_72, %c0_73, %c1_74, %c1_75, %c0_76] : memref<1x2x2x9x9x16xbf16, #tpu.memory_space<vmem>>, vector<1x1x1x8x8x16xbf16>
    %25 = vector.shape_cast %24 : vector<1x1x1x8x8x16xbf16> to vector<1x8x8x16xbf16>
    %c0_77 = arith.constant 0 : index
    %c0_78 = arith.constant 0 : index
    %c0_79 = arith.constant 0 : index
    %c128 = arith.constant 128 : index
    %26 = vector.load %arg9[%c0_77, %c0_78, %c0_79, %c128] : memref<1x8x8x144xbf16, #tpu.memory_space<vmem>>, vector<1x8x8x16xbf16>
    tpu.vector_store %arg9[%c0_77, %c0_78, %c0_79, %c128], %25 {strides = array<i32>} : memref<1x8x8x144xbf16, #tpu.memory_space<vmem>>, vector<1x8x8x16xbf16>,
    %c0_80 = arith.constant 0 : index
    %c0_81 = arith.constant 0 : index
    %c0_82 = arith.constant 0 : index
    %c0_83 = arith.constant 0 : index
    %27 = vector.load %arg9[%c0_80, %c0_81, %c0_82, %c0_83] : memref<1x8x8x144xbf16, #tpu.memory_space<vmem>>, vector<1x8x8x144xbf16>
    %28 = vector.shape_cast %27 : vector<1x8x8x144xbf16> to vector<64x144xbf16>
    %c0_84 = arith.constant 0 : index
    %c0_85 = arith.constant 0 : index
    %29 = vector.load %arg2[%c0_84, %c0_85] : memref<144x32xbf16, #tpu.memory_space<vmem>>, vector<144x32xbf16>
    %cst = arith.constant dense<0.000000e+00> : vector<64x32xf32>
    %30 = tpu.matmul %28, %29, %cst {dimension_numbers = #tpu.dot_dimension_numbers<[1], [0], [0], [1], [0, 0, 1, 1], [], []>} : vector<64x144xbf16>, vector<144x32xbf16>, vector<64x32xf32> -> vector<64x32xf32>
    %c0_86 = arith.constant 0 : index
    %c0_87 = arith.constant 0 : index
    %31 = vector.load %arg4[%c0_86, %c0_87] : memref<1x32xf32, #tpu.memory_space<vmem>>, vector<1x32xf32>
    %32 = vector.broadcast %31 : vector<1x32xf32> to vector<64x32xf32>
    %33 = arith.mulf %30, %32 : vector<64x32xf32>
    %c0_88 = arith.constant 0 : index
    %c0_89 = arith.constant 0 : index
    %34 = vector.load %arg5[%c0_88, %c0_89] : memref<1x32xf32, #tpu.memory_space<vmem>>, vector<1x32xf32>
    %35 = vector.broadcast %34 : vector<1x32xf32> to vector<64x32xf32>
    %36 = arith.addf %33, %35 : vector<64x32xf32>
    %cst_90 = arith.constant 0.000000e+00 : f32
    %37 = vector.broadcast %cst_90 : f32 to vector<64x32xf32>
    %38 = arith.maximumf %36, %37 : vector<64x32xf32>
    %39 = arith.truncf %38 : vector<64x32xf32> to vector<64x32xbf16>
    %c0_91 = arith.constant 0 : index
    %c0_92 = arith.constant 0 : index
    %40 = vector.load %arg3[%c0_91, %c0_92] : memref<32x32xbf16, #tpu.memory_space<vmem>>, vector<32x32xbf16>
    %cst_93 = arith.constant dense<0.000000e+00> : vector<64x32xf32>
    %41 = tpu.matmul %39, %40, %cst_93 {dimension_numbers = #tpu.dot_dimension_numbers<[1], [0], [0], [1], [0, 0, 1, 1], [], []>} : vector<64x32xbf16>, vector<32x32xbf16>, vector<64x32xf32> -> vector<64x32xf32>
    %c0_94 = arith.constant 0 : index
    %c0_95 = arith.constant 0 : index
    %42 = vector.load %arg6[%c0_94, %c0_95] : memref<1x32xf32, #tpu.memory_space<vmem>>, vector<1x32xf32>
    %43 = vector.broadcast %42 : vector<1x32xf32> to vector<64x32xf32>
    %44 = arith.mulf %41, %43 : vector<64x32xf32>
    %c0_96 = arith.constant 0 : index
    %c0_97 = arith.constant 0 : index
    %45 = vector.load %arg7[%c0_96, %c0_97] : memref<1x32xf32, #tpu.memory_space<vmem>>, vector<1x32xf32>
    %46 = vector.broadcast %45 : vector<1x32xf32> to vector<64x32xf32>
    %47 = arith.addf %44, %46 : vector<64x32xf32>
    %48 = vector.shape_cast %47 : vector<64x32xf32> to vector<1x64x32xf32>
    %c0_98 = arith.constant 0 : index
    %c0_99 = arith.constant 0 : index
    %c0_100 = arith.constant 0 : index
    %49 = vector.load %arg8[%c0_98, %c0_99, %c0_100] : memref<1x64x32xf32, #tpu.memory_space<vmem>>, vector<1x64x32xf32>
    tpu.vector_store %arg8[%c0_98, %c0_99, %c0_100], %48 {strides = array<i32>} : memref<1x64x32xf32, #tpu.memory_space<vmem>>, vector<1x64x32xf32>,
    return
  }
  func.func @transform_0(%arg0: i32) -> (i32, i32, i32, i32, i32, i32) {
    %c0_i32 = arith.constant 0 : i32
    %c0_i32_0 = arith.constant 0 : i32
    %c0_i32_1 = arith.constant 0 : i32
    %c0_i32_2 = arith.constant 0 : i32
    %c0_i32_3 = arith.constant 0 : i32
    %c0_i32_4 = arith.constant 0 : i32
    return %arg0, %c0_i32, %c0_i32_0, %c0_i32_1, %c0_i32_2, %c0_i32_3 : i32, i32, i32, i32, i32, i32
  }
  func.func @transform_1(%arg0: i32) -> (i32, i32) {
    %c0_i32 = arith.constant 0 : i32
    %c0_i32_0 = arith.constant 0 : i32
    %c0_i32_1 = arith.constant 0 : i32
    return %c0_i32, %c0_i32_0 : i32, i32
  }
  func.func @transform_2(%arg0: i32) -> (i32, i32) {
    %c0_i32 = arith.constant 0 : i32
    %c0_i32_0 = arith.constant 0 : i32
    %c0_i32_1 = arith.constant 0 : i32
    return %c0_i32, %c0_i32_0 : i32, i32
  }
  func.func @transform_3(%arg0: i32) -> (i32, i32) {
    %c0_i32 = arith.constant 0 : i32
    %c0_i32_0 = arith.constant 0 : i32
    %c0_i32_1 = arith.constant 0 : i32
    return %c0_i32, %c0_i32_0 : i32, i32
  }
  func.func @transform_4(%arg0: i32) -> (i32, i32) {
    %c0_i32 = arith.constant 0 : i32
    %c0_i32_0 = arith.constant 0 : i32
    %c0_i32_1 = arith.constant 0 : i32
    return %c0_i32, %c0_i32_0 : i32, i32
  }
  func.func @transform_5(%arg0: i32) -> (i32, i32) {
    %c0_i32 = arith.constant 0 : i32
    %c0_i32_0 = arith.constant 0 : i32
    %c0_i32_1 = arith.constant 0 : i32
    return %c0_i32, %c0_i32_0 : i32, i32
  }
  func.func @transform_6(%arg0: i32) -> (i32, i32) {
    %c0_i32 = arith.constant 0 : i32
    %c0_i32_0 = arith.constant 0 : i32
    %c0_i32_1 = arith.constant 0 : i32
    return %c0_i32, %c0_i32_0 : i32, i32
  }
  func.func @transform_7(%arg0: i32) -> (i32, i32, i32) {
    %c0_i32 = arith.constant 0 : i32
    %c0_i32_0 = arith.constant 0 : i32
    %c0_i32_1 = arith.constant 0 : i32
    return %arg0, %c0_i32, %c0_i32_0 : i32, i32, i32
  }
}

</mosaic_0001>

<llo_original>
// kernel: down_sample_forward.1
$region0: #{down_sample_forward.1}
  #allocation0 [shape = 'u32[]', space=smem, size = 0x4, offset = 0x4, fixed_abs, tag = 'smem constant byte address 0x4 - core index']
  #allocation1 [shape = 'u32[144,128]{1,0:T(1,128)}', space=vmem, size = 0x12000, scoped, tag = 'internal scratch']
  #allocation2 [shape = 'bf16[1,8,8,144]{3,2,1,0:T(8,128)(2,1)}', space=vmem, size = 0x8000, scoped, tag = 'scratch operand']
  %s0 = inlined_call_operand.vmem [shape: bf16[2,2,2,9,9,16], index: 0, kind: input, shape index: {}]
  %s1 = inlined_call_operand.vmem [shape: bf16[144,32], index: 1, kind: input, shape index: {}]
  %s2 = inlined_call_operand.vmem [shape: bf16[32,32], index: 2, kind: input, shape index: {}]
  %s3 = inlined_call_operand.vmem [shape: f32[1,32], index: 3, kind: input, shape index: {}]
  %s4 = inlined_call_operand.vmem [shape: f32[1,32], index: 4, kind: input, shape index: {}]
  %s5 = inlined_call_operand.vmem [shape: f32[1,32], index: 5, kind: input, shape index: {}]
  %s6 = inlined_call_operand.vmem [shape: f32[1,32], index: 6, kind: input, shape index: {}]
  %s7 = inlined_call_operand.hbm [shape: f32[2,64,32], index: 7, kind: output, shape index: {}]
  %s8 = sld [smem:[#allocation0]]
  $region61: #{down_sample_forward.1} parent=0
    _
  %s10 = ssub.s32 1, %s8
  %s11 = scalar_select 0, %s10, %s8
  $region1: #{down_sample_forward.1} parent=0
    #allocation3 [shape = 'u8[65536]{0}', space=vmem, size = 0x10000, scoped, tag = 'output window, operand 0']
    #allocation4 [shape = 's32[2]{0}', space=sflag, size = 0x8, scoped, tag = 'scoped memory for down_sample_forward.1']
    %12 = vsyncpa [#allocation4], 0
    %s13 = scalar_lea.sflag [#allocation4], 1
    %14 = vsyncpa %s13, 0
    loop: start=0, step=1, limit=4
    $region2: #{down_sample_forward.1} parent=1 // loop_pre_header
      _
    $region3: #{down_sample_forward.1} parent=1 // loop_header
      %s16 = sphi 0, %s20
      %p17 = scmp.ge.s32.totalorder %s16, 4
      %s26 = sphi 0, %s28
      %s29 = sphi 0, %s26
      %s30 = sphi 0, %s29
      %s46 = sphi 0, %s30
      %s50 = sphi 0, %s50
      %s52 = sphi 0, %s50
      %s53 = sphi 0, %s52
      %s67 = sphi 0, %s53
      %s71 = sphi 0, %s71
      %s73 = sphi 0, %s71
      %s74 = sphi 0, %s73
      %s88 = sphi 0, %s74
      %s92 = sphi 0, %s92
      %s94 = sphi 0, %s92
      %s95 = sphi 0, %s94
      %s109 = sphi 0, %s95
      %s113 = sphi 0, %s113
      %s115 = sphi 0, %s113
      %s116 = sphi 0, %s115
      %s130 = sphi 0, %s116
      %s134 = sphi 0, %s134
      %s136 = sphi 0, %s134
      %s137 = sphi 0, %s136
      %s151 = sphi 0, %s137
      %s155 = sphi 0, %s155
      %s157 = sphi 0, %s155
      %s158 = sphi 0, %s157
      %s172 = sphi 0, %s158
      %s178 = sphi 0, %s180
      %s181 = sphi 0, %s178
      %s182 = sphi 0, %s181
      %s198 = sphi 0, %s182
    $region4: #{down_sample_forward.1} parent=1 // loop_header_branch
      %19 = sbr.rel (%p17) target = $region8
    $region5: #{down_sample_forward.1} parent=1 // loop_body
      %s21 = ssub.s32 %s16, 1
      %s22 = ssub.s32 %s16, 2
      %s23 = sadd.s32 %s16, 1
      %s24 = ssub.s32 %s16, %s23
      %p25 = scmp.eq.s32.totalorder %s24, 0
      %s27 = sadd.s32 %s26, 1
      %s28 = scalar_select %p25, %s26, %s27
      %p31 = pneg %p25
      %p32 = scmp.eq.s32.totalorder %s16, 1
      %p33 = por %p31, %p32
      %p34 = scmp.ne.s32.totalorder %s26, %s29
      %p35 = scmp.eq.s32.totalorder %s16, 0
      %p36 = por %p34, %p35
      %p37 = scmp.ne.s32.totalorder %s26, %s29
      %p38 = scmp.eq.s32.totalorder %s21, 1
      %p39 = por %p37, %p38
      %p40 = scmp.ne.s32.totalorder %s29, %s30
      %p41 = scmp.eq.s32.totalorder %s21, 0
      %p42 = por %p40, %p41
      %p43 = scmp.ne.s32.totalorder %s29, %s30
      %p44 = scmp.eq.s32.totalorder %s22, 1
      %p45 = por %p43, %p44
      %p47 = scmp.ne.s32.totalorder %s30, %s46
      %p48 = scmp.eq.s32.totalorder %s22, 0
      %p49 = por %p47, %p48
      %s51 = sadd.s32 %s50, 1
      %p54 = scmp.eq.s32.totalorder %s16, 1
      %p55 = scmp.ne.s32.totalorder %s50, %s52
      %p56 = scmp.eq.s32.totalorder %s16, 0
      %p57 = por %p55, %p56
      %p58 = scmp.ne.s32.totalorder %s50, %s52
      %p59 = scmp.eq.s32.totalorder %s21, 1
      %p60 = por %p58, %p59
      %p61 = scmp.ne.s32.totalorder %s52, %s53
      %p62 = scmp.eq.s32.totalorder %s21, 0
      %p63 = por %p61, %p62
      %p64 = scmp.ne.s32.totalorder %s52, %s53
      %p65 = scmp.eq.s32.totalorder %s22, 1
      %p66 = por %p64, %p65
      %p68 = scmp.ne.s32.totalorder %s53, %s67
      %p69 = scmp.eq.s32.totalorder %s22, 0
      %p70 = por %p68, %p69
      %s72 = sadd.s32 %s71, 1
      %p75 = scmp.eq.s32.totalorder %s16, 1
      %p76 = scmp.ne.s32.totalorder %s71, %s73
      %p77 = scmp.eq.s32.totalorder %s16, 0
      %p78 = por %p76, %p77
      %p79 = scmp.ne.s32.totalorder %s71, %s73
      %p80 = scmp.eq.s32.totalorder %s21, 1
      %p81 = por %p79, %p80
      %p82 = scmp.ne.s32.totalorder %s73, %s74
      %p83 = scmp.eq.s32.totalorder %s21, 0
      %p84 = por %p82, %p83
      %p85 = scmp.ne.s32.totalorder %s73, %s74
      %p86 = scmp.eq.s32.totalorder %s22, 1
      %p87 = por %p85, %p86
      %p89 = scmp.ne.s32.totalorder %s74, %s88
      %p90 = scmp.eq.s32.totalorder %s22, 0
      %p91 = por %p89, %p90
      %s93 = sadd.s32 %s92, 1
      %p96 = scmp.eq.s32.totalorder %s16, 1
      %p97 = scmp.ne.s32.totalorder %s92, %s94
      %p98 = scmp.eq.s32.totalorder %s16, 0
      %p99 = por %p97, %p98
      %p100 = scmp.ne.s32.totalorder %s92, %s94
      %p101 = scmp.eq.s32.totalorder %s21, 1
      %p102 = por %p100, %p101
      %p103 = scmp.ne.s32.totalorder %s94, %s95
      %p104 = scmp.eq.s32.totalorder %s21, 0
      %p105 = por %p103, %p104
      %p106 = scmp.ne.s32.totalorder %s94, %s95
      %p107 = scmp.eq.s32.totalorder %s22, 1
      %p108 = por %p106, %p107
      %p110 = scmp.ne.s32.totalorder %s95, %s109
      %p111 = scmp.eq.s32.totalorder %s22, 0
      %p112 = por %p110, %p111
      %s114 = sadd.s32 %s113, 1
      %p117 = scmp.eq.s32.totalorder %s16, 1
      %p118 = scmp.ne.s32.totalorder %s113, %s115
      %p119 = scmp.eq.s32.totalorder %s16, 0
      %p120 = por %p118, %p119
      %p121 = scmp.ne.s32.totalorder %s113, %s115
      %p122 = scmp.eq.s32.totalorder %s21, 1
      %p123 = por %p121, %p122
      %p124 = scmp.ne.s32.totalorder %s115, %s116
      %p125 = scmp.eq.s32.totalorder %s21, 0
      %p126 = por %p124, %p125
      %p127 = scmp.ne.s32.totalorder %s115, %s116
      %p128 = scmp.eq.s32.totalorder %s22, 1
      %p129 = por %p127, %p128
      %p131 = scmp.ne.s32.totalorder %s116, %s130
      %p132 = scmp.eq.s32.totalorder %s22, 0
      %p133 = por %p131, %p132
      %s135 = sadd.s32 %s134, 1
      %p138 = scmp.eq.s32.totalorder %s16, 1
      %p139 = scmp.ne.s32.totalorder %s134, %s136
      %p140 = scmp.eq.s32.totalorder %s16, 0
      %p141 = por %p139, %p140
      %p142 = scmp.ne.s32.totalorder %s134, %s136
      %p143 = scmp.eq.s32.totalorder %s21, 1
      %p144 = por %p142, %p143
      %p145 = scmp.ne.s32.totalorder %s136, %s137
      %p146 = scmp.eq.s32.totalorder %s21, 0
      %p147 = por %p145, %p146
      %p148 = scmp.ne.s32.totalorder %s136, %s137
      %p149 = scmp.eq.s32.totalorder %s22, 1
      %p150 = por %p148, %p149
      %p152 = scmp.ne.s32.totalorder %s137, %s151
      %p153 = scmp.eq.s32.totalorder %s22, 0
      %p154 = por %p152, %p153
      %s156 = sadd.s32 %s155, 1
      %p159 = scmp.eq.s32.totalorder %s16, 1
      %p160 = scmp.ne.s32.totalorder %s155, %s157
      %p161 = scmp.eq.s32.totalorder %s16, 0
      %p162 = por %p160, %p161
      %p163 = scmp.ne.s32.totalorder %s155, %s157
      %p164 = scmp.eq.s32.totalorder %s21, 1
      %p165 = por %p163, %p164
      %p166 = scmp.ne.s32.totalorder %s157, %s158
      %p167 = scmp.eq.s32.totalorder %s21, 0
      %p168 = por %p166, %p167
      %p169 = scmp.ne.s32.totalorder %s157, %s158
      %p170 = scmp.eq.s32.totalorder %s22, 1
      %p171 = por %p169, %p170
      %p173 = scmp.ne.s32.totalorder %s158, %s172
      %p174 = scmp.eq.s32.totalorder %s22, 0
      %p175 = por %p173, %p174
      %s176 = ssub.s32 %s16, %s23
      %p177 = scmp.eq.s32.totalorder %s176, 0
      %s179 = sadd.s32 %s178, 1
      %s180 = scalar_select %p177, %s178, %s179
      %p183 = pneg %p177
      %p184 = scmp.eq.s32.totalorder %s16, 1
      %p185 = por %p183, %p184
      %p186 = scmp.ne.s32.totalorder %s178, %s181
      %p187 = scmp.eq.s32.totalorder %s16, 0
      %p188 = por %p186, %p187
      %p189 = scmp.ne.s32.totalorder %s178, %s181
      %p190 = scmp.eq.s32.totalorder %s21, 1
      %p191 = por %p189, %p190
      %p192 = scmp.ne.s32.totalorder %s181, %s182
      %p193 = scmp.eq.s32.totalorder %s21, 0
      %p194 = por %p192, %p193
      %p195 = scmp.ne.s32.totalorder %s181, %s182
      %p196 = scmp.eq.s32.totalorder %s22, 1
      %p197 = por %p195, %p196
      %p199 = scmp.ne.s32.totalorder %s182, %s198
      %p200 = scmp.eq.s32.totalorder %s22, 0
      %p201 = por %p199, %p200
      %p202 = scmp.le.s32.totalorder 1, %s16
      %p203 = scmp.lt.s32.totalorder %s16, 3
      %p204 = pnand %p202, %p203
      %p205 = pneg %p204
      // Predicated region
      $region9: #{down_sample_forward.1} parent=5 // pred_check
        _
      $region10: #{down_sample_forward.1} parent=5 // pred_check_branch
        %207 = sbr.rel (%p204) target = $region12
      $region11: #{down_sample_forward.1} parent=5 // pred_region
        %s208 = ssub.s32 %s16, 1
        // Predicated region
        $region13: #{down_sample_forward.1} parent=11 // pred_check
          %p209 = pneg %p63
        $region14: #{down_sample_forward.1} parent=11 // pred_check_branch
          %211 = sbr.rel (%p209) target = $region16
        $region15: #{down_sample_forward.1} parent=11 // pred_region
          _
        $region16: #{down_sample_forward.1} parent=11 // pred_fallthru
          _
        // Predicated region
        $region17: #{down_sample_forward.1} parent=11 // pred_check
          %p212 = pneg %p84
        $region18: #{down_sample_forward.1} parent=11 // pred_check_branch
          %214 = sbr.rel (%p212) target = $region20
        $region19: #{down_sample_forward.1} parent=11 // pred_region
          _
        $region20: #{down_sample_forward.1} parent=11 // pred_fallthru
          _
        // Predicated region
        $region21: #{down_sample_forward.1} parent=11 // pred_check
          %p215 = pneg %p105
        $region22: #{down_sample_forward.1} parent=11 // pred_check_branch
          %217 = sbr.rel (%p215) target = $region24
        $region23: #{down_sample_forward.1} parent=11 // pred_region
          _
        $region24: #{down_sample_forward.1} parent=11 // pred_fallthru
          _
        // Predicated region
        $region25: #{down_sample_forward.1} parent=11 // pred_check
          %p218 = pneg %p126
        $region26: #{down_sample_forward.1} parent=11 // pred_check_branch
          %220 = sbr.rel (%p218) target = $region28
        $region27: #{down_sample_forward.1} parent=11 // pred_region
          _
        $region28: #{down_sample_forward.1} parent=11 // pred_fallthru
          _
        // Predicated region
        $region29: #{down_sample_forward.1} parent=11 // pred_check
          %p221 = pneg %p147
        $region30: #{down_sample_forward.1} parent=11 // pred_check_branch
          %223 = sbr.rel (%p221) target = $region32
        $region31: #{down_sample_forward.1} parent=11 // pred_region
          _
        $region32: #{down_sample_forward.1} parent=11 // pred_fallthru
          _
        // Predicated region
        $region33: #{down_sample_forward.1} parent=11 // pred_check
          %p224 = pneg %p168
        $region34: #{down_sample_forward.1} parent=11 // pred_check_branch
          %226 = sbr.rel (%p224) target = $region36
        $region35: #{down_sample_forward.1} parent=11 // pred_region
          _
        $region36: #{down_sample_forward.1} parent=11 // pred_fallthru
          _
      $region12: #{down_sample_forward.1} parent=5 // pred_fallthru
        _
      %p227 = scmp.lt.s32.totalorder %s16, 2
      // Predicated region
      $region37: #{down_sample_forward.1} parent=5 // pred_check
        %p228 = pneg %p227
      $region38: #{down_sample_forward.1} parent=5 // pred_check_branch
        %230 = sbr.rel (%p228) target = $region40
      $region39: #{down_sample_forward.1} parent=5 // pred_region
        // Predicated region
        $region41: #{down_sample_forward.1} parent=39 // pred_check
          %p231 = pneg %p36
        $region42: #{down_sample_forward.1} parent=39 // pred_check_branch
          %233 = sbr.rel (%p231) target = $region44
        $region43: #{down_sample_forward.1} parent=39 // pred_region
          %p234 = scmp.lt.s32.totalorder %s16, 1
          %s235 = scalar_select %p234, %s16, 1
          %s236 = smul.addr %s235, 72
          %s237 = smul.addr %s236, 4
          %s238 = scalar_lea.vmem %s0, %s237
        $region44: #{down_sample_forward.1} parent=39 // pred_fallthru
          _
      $region40: #{down_sample_forward.1} parent=5 // pred_fallthru
        _
      %p239 = scmp.le.s32.totalorder 1, %s16
      %p240 = scmp.lt.s32.totalorder %s16, 3
      %p241 = pnand %p239, %p240
      %p242 = pneg %p241
      // Predicated region
      $region45: #{down_sample_forward.1} parent=5 // pred_check
        _
      $region46: #{down_sample_forward.1} parent=5 // pred_check_branch
        %244 = sbr.rel (%p241) target = $region48
      $region47: #{down_sample_forward.1} parent=5 // pred_region
        %s245 = ssub.s32 %s16, 1
        %p246 = scmp.lt.s32.totalorder %s21, 1
        %s247 = scalar_select %p246, %s21, 1
        %s248 = smul.addr %s247, 72
        %s249 = smul.addr %s248, 4
        %s250 = scalar_lea.vmem %s0, %s249
        %p251 = pneg %p42
        %p252 = pneg %p39
        %p253 = pneg %p63
        %p254 = pneg %p60
        %p255 = pneg %p84
        %p256 = pneg %p81
        %p257 = pneg %p105
        %p258 = pneg %p102
        %p259 = pneg %p126
        %p260 = pneg %p123
        %p261 = pneg %p147
        %p262 = pneg %p144
        %p263 = pneg %p168
        %p264 = pneg %p165
        %p265 = pneg %p194
        %p266 = pneg %p191
        %s267 = sand.u32 %s181, 1
        %s268 = scalar_lea.sflag [#allocation4], %s267
        %s269 = sand.u32 %s181, 1
        %s270 = smul.addr %s269, 64
        %s271 = scalar_lea.vmem [#allocation3], %s270
        %p272 = scmp.lt.s32.totalorder %s21, 1
        %s273 = scalar_select %p272, %s21, 1
        %s274 = smul.addr %s273, 72
        %s275 = smul.addr %s274, 4
        %s276 = scalar_lea.vmem %s0, %s275
        %v278 = vld [vmem:[%s276] sm:$0xf]
        %v279 = vld [vmem:[%s276 + $0x8] sm:$0xf]
        %v280 = vld [vmem:[%s276 + $0x10] sm:$0xf]
        %v281 = vld [vmem:[%s276 + $0x18] sm:$0xf]
        %v282 = vld [vmem:[%s276 + $0x20] sm:$0xf]
        %v283 = vld [vmem:[%s276 + $0x28] sm:$0xf]
        %v284 = vld [vmem:[%s276 + $0x30] sm:$0xf]
        %v285 = vld [vmem:[%s276 + $0x38] sm:$0xf]
        %vm286 = vcmask 125952
        %287 = vst.msk [vmem:[#allocation2] sm:$0xf] %vm286, %v278
        %288 = vst.msk [vmem:[#allocation2 + $0x8] sm:$0xf] %vm286, %v279
        %289 = vst.msk [vmem:[#allocation2 + $0x10] sm:$0xf] %vm286, %v280
        %290 = vst.msk [vmem:[#allocation2 + $0x18] sm:$0xf] %vm286, %v281
        %291 = vst.msk [vmem:[#allocation2 + $0x20] sm:$0xf] %vm286, %v282
        %292 = vst.msk [vmem:[#allocation2 + $0x28] sm:$0xf] %vm286, %v283
        %293 = vst.msk [vmem:[#allocation2 + $0x30] sm:$0xf] %vm286, %v284
        %294 = vst.msk [vmem:[#allocation2 + $0x38] sm:$0xf] %vm286, %v285
        %s295 = scalar_lea.vmem %s276, 72
        %v296 = vld [vmem:[%s295] sm:$0xf]
        %v297 = vld [vmem:[%s295 + $0x8] sm:$0xf]
        %v298 = vld [vmem:[%s295 + $0x10] sm:$0xf]
        %v299 = vld [vmem:[%s295 + $0x18] sm:$0xf]
        %v300 = vld [vmem:[%s295 + $0x20] sm:$0xf]
        %v301 = vld [vmem:[%s295 + $0x28] sm:$0xf]
        %v302 = vld [vmem:[%s295 + $0x30] sm:$0xf]
        %v303 = vld [vmem:[%s295 + $0x38] sm:$0xf]
        %312 = vrot.lane.b32.xlu0 %v296, 16
        %v313 = vpop.permute.xlu0 %312
        %314 = vrot.lane.b32.xlu0 %v297, 16
        %v315 = vpop.permute.xlu0 %314
        %316 = vrot.lane.b32.xlu0 %v298, 16
        %v317 = vpop.permute.xlu0 %316
        %318 = vrot.lane.b32.xlu0 %v299, 16
        %v319 = vpop.permute.xlu0 %318
        %320 = vrot.lane.b32.xlu0 %v300, 16
        %v321 = vpop.permute.xlu0 %320
        %322 = vrot.lane.b32.xlu0 %v301, 16
        %v323 = vpop.permute.xlu0 %322
        %324 = vrot.lane.b32.xlu0 %v302, 16
        %v325 = vpop.permute.xlu0 %324
        %326 = vrot.lane.b32.xlu0 %v303, 16
        %v327 = vpop.permute.xlu0 %326
        %vm336 = vcmask 257152
        %337 = vst.msk [vmem:[#allocation2] sm:$0xf] %vm336, %v313
        %338 = vst.msk [vmem:[#allocation2 + $0x8] sm:$0xf] %vm336, %v315
        %339 = vst.msk [vmem:[#allocation2 + $0x10] sm:$0xf] %vm336, %v317
        %340 = vst.msk [vmem:[#allocation2 + $0x18] sm:$0xf] %vm336, %v319
        %341 = vst.msk [vmem:[#allocation2 + $0x20] sm:$0xf] %vm336, %v321
        %342 = vst.msk [vmem:[#allocation2 + $0x28] sm:$0xf] %vm336, %v323
        %343 = vst.msk [vmem:[#allocation2 + $0x30] sm:$0xf] %vm336, %v325
        %344 = vst.msk [vmem:[#allocation2 + $0x38] sm:$0xf] %vm336, %v327
        %v345 = vld [vmem:[%s276] sm:$0xf]
        %v346 = vld [vmem:[%s276 + $0x4] sm:$0x1]
        %v347 = vld [vmem:[%s276 + $0x8] sm:$0xf]
        %v348 = vld [vmem:[%s276 + $0xc] sm:$0x1]
        %v349 = vld [vmem:[%s276 + $0x10] sm:$0xf]
        %v350 = vld [vmem:[%s276 + $0x14] sm:$0x1]
        %v351 = vld [vmem:[%s276 + $0x18] sm:$0xf]
        %v352 = vld [vmem:[%s276 + $0x1c] sm:$0x1]
        %v353 = vld [vmem:[%s276 + $0x20] sm:$0xf]
        %v354 = vld [vmem:[%s276 + $0x24] sm:$0x1]
        %v355 = vld [vmem:[%s276 + $0x28] sm:$0xf]
        %v356 = vld [vmem:[%s276 + $0x2c] sm:$0x1]
        %v357 = vld [vmem:[%s276 + $0x30] sm:$0xf]
        %v358 = vld [vmem:[%s276 + $0x34] sm:$0x1]
        %v359 = vld [vmem:[%s276 + $0x38] sm:$0xf]
        %v360 = vld [vmem:[%s276 + $0x3c] sm:$0x1]
        %vm361 = vsmask.f32 3328
        %vm362 = vsmask.f32 7440
        %vm363 = vmor %vm361, %vm362
        %v365 = vshrl.u32 %v345, 16
        %v367 = vrot.slane %v365, 4
        %v368 = vshll.u32 %v345, 16
        %v370 = vrot.slane %v368, 5
        %v371 = vor.u32 %v367, %v370
        %v372 = vrot.slane %v371, 4
        %v374 = vshll.u32 %v346, 16
        %v376 = vrot.slane %v374, 5
        %v377 = vsel %vm363, %v372, %v376
        %v379 = vshrl.u32 %v347, 16
        %v381 = vrot.slane %v379, 4
        %v382 = vshll.u32 %v347, 16
        %v384 = vrot.slane %v382, 5
        %v385 = vor.u32 %v381, %v384
        %v386 = vrot.slane %v385, 4
        %v388 = vshll.u32 %v348, 16
        %v390 = vrot.slane %v388, 5
        %v391 = vsel %vm363, %v386, %v390
        %v393 = vshrl.u32 %v349, 16
        %v395 = vrot.slane %v393, 4
        %v396 = vshll.u32 %v349, 16
        %v398 = vrot.slane %v396, 5
        %v399 = vor.u32 %v395, %v398
        %v400 = vrot.slane %v399, 4
        %v402 = vshll.u32 %v350, 16
        %v404 = vrot.slane %v402, 5
        %v405 = vsel %vm363, %v400, %v404
        %v407 = vshrl.u32 %v351, 16
        %v409 = vrot.slane %v407, 4
        %v410 = vshll.u32 %v351, 16
        %v412 = vrot.slane %v410, 5
        %v413 = vor.u32 %v409, %v412
        %v414 = vrot.slane %v413, 4
        %v416 = vshll.u32 %v352, 16
        %v418 = vrot.slane %v416, 5
        %v419 = vsel %vm363, %v414, %v418
        %v421 = vshrl.u32 %v353, 16
        %v423 = vrot.slane %v421, 4
        %v424 = vshll.u32 %v353, 16
        %v426 = vrot.slane %v424, 5
        %v427 = vor.u32 %v423, %v426
        %v428 = vrot.slane %v427, 4
        %v430 = vshll.u32 %v354, 16
        %v432 = vrot.slane %v430, 5
        %v433 = vsel %vm363, %v428, %v432
        %v435 = vshrl.u32 %v355, 16
        %v437 = vrot.slane %v435, 4
        %v438 = vshll.u32 %v355, 16
        %v440 = vrot.slane %v438, 5
        %v441 = vor.u32 %v437, %v440
        %v442 = vrot.slane %v441, 4
        %v444 = vshll.u32 %v356, 16
        %v446 = vrot.slane %v444, 5
        %v447 = vsel %vm363, %v442, %v446
        %v449 = vshrl.u32 %v357, 16
        %v451 = vrot.slane %v449, 4
        %v452 = vshll.u32 %v357, 16
        %v454 = vrot.slane %v452, 5
        %v455 = vor.u32 %v451, %v454
        %v456 = vrot.slane %v455, 4
        %v458 = vshll.u32 %v358, 16
        %v460 = vrot.slane %v458, 5
        %v461 = vsel %vm363, %v456, %v460
        %v463 = vshrl.u32 %v359, 16
        %v465 = vrot.slane %v463, 4
        %v466 = vshll.u32 %v359, 16
        %v468 = vrot.slane %v466, 5
        %v469 = vor.u32 %v465, %v468
        %v470 = vrot.slane %v469, 4
        %v472 = vshll.u32 %v360, 16
        %v474 = vrot.slane %v472, 5
        %v475 = vsel %vm363, %v470, %v474
        %476 = vrot.lane.b32.xlu0 %v377, 32
        %v477 = vpop.permute.xlu0 %476
        %478 = vrot.lane.b32.xlu0 %v391, 32
        %v479 = vpop.permute.xlu0 %478
        %480 = vrot.lane.b32.xlu0 %v405, 32
        %v481 = vpop.permute.xlu0 %480
        %482 = vrot.lane.b32.xlu0 %v419, 32
        %v483 = vpop.permute.xlu0 %482
        %484 = vrot.lane.b32.xlu0 %v433, 32
        %v485 = vpop.permute.xlu0 %484
        %486 = vrot.lane.b32.xlu0 %v447, 32
        %v487 = vpop.permute.xlu0 %486
        %488 = vrot.lane.b32.xlu0 %v461, 32
        %v489 = vpop.permute.xlu0 %488
        %490 = vrot.lane.b32.xlu0 %v475, 32
        %v491 = vpop.permute.xlu0 %490
        %vm500 = vcmask 388352
        %501 = vst.msk [vmem:[#allocation2] sm:$0xf] %vm500, %v477
        %502 = vst.msk [vmem:[#allocation2 + $0x8] sm:$0xf] %vm500, %v479
        %503 = vst.msk [vmem:[#allocation2 + $0x10] sm:$0xf] %vm500, %v481
        %504 = vst.msk [vmem:[#allocation2 + $0x18] sm:$0xf] %vm500, %v483
        %505 = vst.msk [vmem:[#allocation2 + $0x20] sm:$0xf] %vm500, %v485
        %506 = vst.msk [vmem:[#allocation2 + $0x28] sm:$0xf] %vm500, %v487
        %507 = vst.msk [vmem:[#allocation2 + $0x30] sm:$0xf] %vm500, %v489
        %508 = vst.msk [vmem:[#allocation2 + $0x38] sm:$0xf] %vm500, %v491
        %s509 = scalar_lea.vmem %s276, 144
        %v510 = vld [vmem:[%s509] sm:$0xf]
        %v511 = vld [vmem:[%s509 + $0x8] sm:$0xf]
        %v512 = vld [vmem:[%s509 + $0x10] sm:$0xf]
        %v513 = vld [vmem:[%s509 + $0x18] sm:$0xf]
        %v514 = vld [vmem:[%s509 + $0x20] sm:$0xf]
        %v515 = vld [vmem:[%s509 + $0x28] sm:$0xf]
        %v516 = vld [vmem:[%s509 + $0x30] sm:$0xf]
        %v517 = vld [vmem:[%s509 + $0x38] sm:$0xf]
        %526 = vrot.lane.b32.xlu0 %v510, 48
        %v527 = vpop.permute.xlu0 %526
        %528 = vrot.lane.b32.xlu0 %v511, 48
        %v529 = vpop.permute.xlu0 %528
        %530 = vrot.lane.b32.xlu0 %v512, 48
        %v531 = vpop.permute.xlu0 %530
        %532 = vrot.lane.b32.xlu0 %v513, 48
        %v533 = vpop.permute.xlu0 %532
        %534 = vrot.lane.b32.xlu0 %v514, 48
        %v535 = vpop.permute.xlu0 %534
        %536 = vrot.lane.b32.xlu0 %v515, 48
        %v537 = vpop.permute.xlu0 %536
        %538 = vrot.lane.b32.xlu0 %v516, 48
        %v539 = vpop.permute.xlu0 %538
        %540 = vrot.lane.b32.xlu0 %v517, 48
        %v541 = vpop.permute.xlu0 %540
        %vm550 = vcmask 519552
        %551 = vst.msk [vmem:[#allocation2] sm:$0xf] %vm550, %v527
        %552 = vst.msk [vmem:[#allocation2 + $0x8] sm:$0xf] %vm550, %v529
        %553 = vst.msk [vmem:[#allocation2 + $0x10] sm:$0xf] %vm550, %v531
        %554 = vst.msk [vmem:[#allocation2 + $0x18] sm:$0xf] %vm550, %v533
        %555 = vst.msk [vmem:[#allocation2 + $0x20] sm:$0xf] %vm550, %v535
        %556 = vst.msk [vmem:[#allocation2 + $0x28] sm:$0xf] %vm550, %v537
        %557 = vst.msk [vmem:[#allocation2 + $0x30] sm:$0xf] %vm550, %v539
        %558 = vst.msk [vmem:[#allocation2 + $0x38] sm:$0xf] %vm550, %v541
        %s559 = scalar_lea.vmem %s276, 216
        %v560 = vld [vmem:[%s559] sm:$0xf]
        %v561 = vld [vmem:[%s559 + $0x8] sm:$0xf]
        %v562 = vld [vmem:[%s559 + $0x10] sm:$0xf]
        %v563 = vld [vmem:[%s559 + $0x18] sm:$0xf]
        %v564 = vld [vmem:[%s559 + $0x20] sm:$0xf]
        %v565 = vld [vmem:[%s559 + $0x28] sm:$0xf]
        %v566 = vld [vmem:[%s559 + $0x30] sm:$0xf]
        %v567 = vld [vmem:[%s559 + $0x38] sm:$0xf]
        %576 = vrot.lane.b32.xlu0 %v560, 64
        %v577 = vpop.permute.xlu0 %576
        %578 = vrot.lane.b32.xlu0 %v561, 64
        %v579 = vpop.permute.xlu0 %578
        %580 = vrot.lane.b32.xlu0 %v562, 64
        %v581 = vpop.permute.xlu0 %580
        %582 = vrot.lane.b32.xlu0 %v563, 64
        %v583 = vpop.permute.xlu0 %582
        %584 = vrot.lane.b32.xlu0 %v564, 64
        %v585 = vpop.permute.xlu0 %584
        %586 = vrot.lane.b32.xlu0 %v565, 64
        %v587 = vpop.permute.xlu0 %586
        %588 = vrot.lane.b32.xlu0 %v566, 64
        %v589 = vpop.permute.xlu0 %588
        %590 = vrot.lane.b32.xlu0 %v567, 64
        %v591 = vpop.permute.xlu0 %590
        %vm600 = vcmask 650752
        %601 = vst.msk [vmem:[#allocation2] sm:$0xf] %vm600, %v577
        %602 = vst.msk [vmem:[#allocation2 + $0x8] sm:$0xf] %vm600, %v579
        %603 = vst.msk [vmem:[#allocation2 + $0x10] sm:$0xf] %vm600, %v581
        %604 = vst.msk [vmem:[#allocation2 + $0x18] sm:$0xf] %vm600, %v583
        %605 = vst.msk [vmem:[#allocation2 + $0x20] sm:$0xf] %vm600, %v585
        %606 = vst.msk [vmem:[#allocation2 + $0x28] sm:$0xf] %vm600, %v587
        %607 = vst.msk [vmem:[#allocation2 + $0x30] sm:$0xf] %vm600, %v589
        %608 = vst.msk [vmem:[#allocation2 + $0x38] sm:$0xf] %vm600, %v591
        %v609 = vld [vmem:[%s509] sm:$0xf]
        %v610 = vld [vmem:[%s509 + $0x4] sm:$0x1]
        %v611 = vld [vmem:[%s509 + $0x8] sm:$0xf]
        %v612 = vld [vmem:[%s509 + $0xc] sm:$0x1]
        %v613 = vld [vmem:[%s509 + $0x10] sm:$0xf]
        %v614 = vld [vmem:[%s509 + $0x14] sm:$0x1]
        %v615 = vld [vmem:[%s509 + $0x18] sm:$0xf]
        %v616 = vld [vmem:[%s509 + $0x1c] sm:$0x1]
        %v617 = vld [vmem:[%s509 + $0x20] sm:$0xf]
        %v618 = vld [vmem:[%s509 + $0x24] sm:$0x1]
        %v619 = vld [vmem:[%s509 + $0x28] sm:$0xf]
        %v620 = vld [vmem:[%s509 + $0x2c] sm:$0x1]
        %v621 = vld [vmem:[%s509 + $0x30] sm:$0xf]
        %v622 = vld [vmem:[%s509 + $0x34] sm:$0x1]
        %v623 = vld [vmem:[%s509 + $0x38] sm:$0xf]
        %v624 = vld [vmem:[%s509 + $0x3c] sm:$0x1]
        %v626 = vshrl.u32 %v609, 16
        %v628 = vrot.slane %v626, 4
        %v629 = vshll.u32 %v609, 16
        %v631 = vrot.slane %v629, 5
        %v632 = vor.u32 %v628, %v631
        %v633 = vrot.slane %v632, 4
        %v635 = vshll.u32 %v610, 16
        %v637 = vrot.slane %v635, 5
        %v638 = vsel %vm363, %v633, %v637
        %v640 = vshrl.u32 %v611, 16
        %v642 = vrot.slane %v640, 4
        %v643 = vshll.u32 %v611, 16
        %v645 = vrot.slane %v643, 5
        %v646 = vor.u32 %v642, %v645
        %v647 = vrot.slane %v646, 4
        %v649 = vshll.u32 %v612, 16
        %v651 = vrot.slane %v649, 5
        %v652 = vsel %vm363, %v647, %v651
        %v654 = vshrl.u32 %v613, 16
        %v656 = vrot.slane %v654, 4
        %v657 = vshll.u32 %v613, 16
        %v659 = vrot.slane %v657, 5
        %v660 = vor.u32 %v656, %v659
        %v661 = vrot.slane %v660, 4
        %v663 = vshll.u32 %v614, 16
        %v665 = vrot.slane %v663, 5
        %v666 = vsel %vm363, %v661, %v665
        %v668 = vshrl.u32 %v615, 16
        %v670 = vrot.slane %v668, 4
        %v671 = vshll.u32 %v615, 16
        %v673 = vrot.slane %v671, 5
        %v674 = vor.u32 %v670, %v673
        %v675 = vrot.slane %v674, 4
        %v677 = vshll.u32 %v616, 16
        %v679 = vrot.slane %v677, 5
        %v680 = vsel %vm363, %v675, %v679
        %v682 = vshrl.u32 %v617, 16
        %v684 = vrot.slane %v682, 4
        %v685 = vshll.u32 %v617, 16
        %v687 = vrot.slane %v685, 5
        %v688 = vor.u32 %v684, %v687
        %v689 = vrot.slane %v688, 4
        %v691 = vshll.u32 %v618, 16
        %v693 = vrot.slane %v691, 5
        %v694 = vsel %vm363, %v689, %v693
        %v696 = vshrl.u32 %v619, 16
        %v698 = vrot.slane %v696, 4
        %v699 = vshll.u32 %v619, 16
        %v701 = vrot.slane %v699, 5
        %v702 = vor.u32 %v698, %v701
        %v703 = vrot.slane %v702, 4
        %v705 = vshll.u32 %v620, 16
        %v707 = vrot.slane %v705, 5
        %v708 = vsel %vm363, %v703, %v707
        %v710 = vshrl.u32 %v621, 16
        %v712 = vrot.slane %v710, 4
        %v713 = vshll.u32 %v621, 16
        %v715 = vrot.slane %v713, 5
        %v716 = vor.u32 %v712, %v715
        %v717 = vrot.slane %v716, 4
        %v719 = vshll.u32 %v622, 16
        %v721 = vrot.slane %v719, 5
        %v722 = vsel %vm363, %v717, %v721
        %v724 = vshrl.u32 %v623, 16
        %v726 = vrot.slane %v724, 4
        %v727 = vshll.u32 %v623, 16
        %v729 = vrot.slane %v727, 5
        %v730 = vor.u32 %v726, %v729
        %v731 = vrot.slane %v730, 4
        %v733 = vshll.u32 %v624, 16
        %v735 = vrot.slane %v733, 5
        %v736 = vsel %vm363, %v731, %v735
        %737 = vrot.lane.b32.xlu0 %v638, 80
        %v738 = vpop.permute.xlu0 %737
        %739 = vrot.lane.b32.xlu0 %v652, 80
        %v740 = vpop.permute.xlu0 %739
        %741 = vrot.lane.b32.xlu0 %v666, 80
        %v742 = vpop.permute.xlu0 %741
        %743 = vrot.lane.b32.xlu0 %v680, 80
        %v744 = vpop.permute.xlu0 %743
        %745 = vrot.lane.b32.xlu0 %v694, 80
        %v746 = vpop.permute.xlu0 %745
        %747 = vrot.lane.b32.xlu0 %v708, 80
        %v748 = vpop.permute.xlu0 %747
        %749 = vrot.lane.b32.xlu0 %v722, 80
        %v750 = vpop.permute.xlu0 %749
        %751 = vrot.lane.b32.xlu0 %v736, 80
        %v752 = vpop.permute.xlu0 %751
        %vm761 = vcmask 781952
        %762 = vst.msk [vmem:[#allocation2] sm:$0xf] %vm761, %v738
        %763 = vst.msk [vmem:[#allocation2 + $0x8] sm:$0xf] %vm761, %v740
        %764 = vst.msk [vmem:[#allocation2 + $0x10] sm:$0xf] %vm761, %v742
        %765 = vst.msk [vmem:[#allocation2 + $0x18] sm:$0xf] %vm761, %v744
        %766 = vst.msk [vmem:[#allocation2 + $0x20] sm:$0xf] %vm761, %v746
        %767 = vst.msk [vmem:[#allocation2 + $0x28] sm:$0xf] %vm761, %v748
        %768 = vst.msk [vmem:[#allocation2 + $0x30] sm:$0xf] %vm761, %v750
        %769 = vst.msk [vmem:[#allocation2 + $0x38] sm:$0xf] %vm761, %v752
        %s770 = scalar_lea.vmem %s276, 8
        %v771 = vld [vmem:[%s770] sm:$0xf]
        %v772 = vld [vmem:[%s770 + $0x8] sm:$0xf]
        %v773 = vld [vmem:[%s770 + $0x10] sm:$0xf]
        %v774 = vld [vmem:[%s770 + $0x18] sm:$0xf]
        %v775 = vld [vmem:[%s770 + $0x20] sm:$0xf]
        %v776 = vld [vmem:[%s770 + $0x28] sm:$0xf]
        %v777 = vld [vmem:[%s770 + $0x30] sm:$0xf]
        %v778 = vld [vmem:[%s770 + $0x38] sm:$0xf]
        %787 = vrot.lane.b32.xlu0 %v771, 96
        %v788 = vpop.permute.xlu0 %787
        %789 = vrot.lane.b32.xlu0 %v772, 96
        %v790 = vpop.permute.xlu0 %789
        %791 = vrot.lane.b32.xlu0 %v773, 96
        %v792 = vpop.permute.xlu0 %791
        %793 = vrot.lane.b32.xlu0 %v774, 96
        %v794 = vpop.permute.xlu0 %793
        %795 = vrot.lane.b32.xlu0 %v775, 96
        %v796 = vpop.permute.xlu0 %795
        %797 = vrot.lane.b32.xlu0 %v776, 96
        %v798 = vpop.permute.xlu0 %797
        %799 = vrot.lane.b32.xlu0 %v777, 96
        %v800 = vpop.permute.xlu0 %799
        %801 = vrot.lane.b32.xlu0 %v778, 96
        %v802 = vpop.permute.xlu0 %801
        %vm811 = vcmask 913152
        %812 = vst.msk [vmem:[#allocation2] sm:$0xf] %vm811, %v788
        %813 = vst.msk [vmem:[#allocation2 + $0x8] sm:$0xf] %vm811, %v790
        %814 = vst.msk [vmem:[#allocation2 + $0x10] sm:$0xf] %vm811, %v792
        %815 = vst.msk [vmem:[#allocation2 + $0x18] sm:$0xf] %vm811, %v794
        %816 = vst.msk [vmem:[#allocation2 + $0x20] sm:$0xf] %vm811, %v796
        %817 = vst.msk [vmem:[#allocation2 + $0x28] sm:$0xf] %vm811, %v798
        %818 = vst.msk [vmem:[#allocation2 + $0x30] sm:$0xf] %vm811, %v800
        %819 = vst.msk [vmem:[#allocation2 + $0x38] sm:$0xf] %vm811, %v802
        %s820 = scalar_lea.vmem %s276, 80
        %v821 = vld [vmem:[%s820] sm:$0xf]
        %v822 = vld [vmem:[%s820 + $0x8] sm:$0xf]
        %v823 = vld [vmem:[%s820 + $0x10] sm:$0xf]
        %v824 = vld [vmem:[%s820 + $0x18] sm:$0xf]
        %v825 = vld [vmem:[%s820 + $0x20] sm:$0xf]
        %v826 = vld [vmem:[%s820 + $0x28] sm:$0xf]
        %v827 = vld [vmem:[%s820 + $0x30] sm:$0xf]
        %v828 = vld [vmem:[%s820 + $0x38] sm:$0xf]
        %837 = vrot.lane.b32.xlu0 %v821, 112
        %v838 = vpop.permute.xlu0 %837
        %839 = vrot.lane.b32.xlu0 %v822, 112
        %v840 = vpop.permute.xlu0 %839
        %841 = vrot.lane.b32.xlu0 %v823, 112
        %v842 = vpop.permute.xlu0 %841
        %843 = vrot.lane.b32.xlu0 %v824, 112
        %v844 = vpop.permute.xlu0 %843
        %845 = vrot.lane.b32.xlu0 %v825, 112
        %v846 = vpop.permute.xlu0 %845
        %847 = vrot.lane.b32.xlu0 %v826, 112
        %v848 = vpop.permute.xlu0 %847
        %849 = vrot.lane.b32.xlu0 %v827, 112
        %v850 = vpop.permute.xlu0 %849
        %851 = vrot.lane.b32.xlu0 %v828, 112
        %v852 = vpop.permute.xlu0 %851
        %vm861 = vcmask 1044352
        %862 = vst.msk [vmem:[#allocation2] sm:$0xf] %vm861, %v838
        %863 = vst.msk [vmem:[#allocation2 + $0x8] sm:$0xf] %vm861, %v840
        %864 = vst.msk [vmem:[#allocation2 + $0x10] sm:$0xf] %vm861, %v842
        %865 = vst.msk [vmem:[#allocation2 + $0x18] sm:$0xf] %vm861, %v844
        %866 = vst.msk [vmem:[#allocation2 + $0x20] sm:$0xf] %vm861, %v846
        %867 = vst.msk [vmem:[#allocation2 + $0x28] sm:$0xf] %vm861, %v848
        %868 = vst.msk [vmem:[#allocation2 + $0x30] sm:$0xf] %vm861, %v850
        %869 = vst.msk [vmem:[#allocation2 + $0x38] sm:$0xf] %vm861, %v852
        %v870 = vld [vmem:[%s770] sm:$0xf]
        %v871 = vld [vmem:[%s770 + $0x4] sm:$0x1]
        %v872 = vld [vmem:[%s770 + $0x8] sm:$0xf]
        %v873 = vld [vmem:[%s770 + $0xc] sm:$0x1]
        %v874 = vld [vmem:[%s770 + $0x10] sm:$0xf]
        %v875 = vld [vmem:[%s770 + $0x14] sm:$0x1]
        %v876 = vld [vmem:[%s770 + $0x18] sm:$0xf]
        %v877 = vld [vmem:[%s770 + $0x1c] sm:$0x1]
        %v878 = vld [vmem:[%s770 + $0x20] sm:$0xf]
        %v879 = vld [vmem:[%s770 + $0x24] sm:$0x1]
        %v880 = vld [vmem:[%s770 + $0x28] sm:$0xf]
        %v881 = vld [vmem:[%s770 + $0x2c] sm:$0x1]
        %v882 = vld [vmem:[%s770 + $0x30] sm:$0xf]
        %v883 = vld [vmem:[%s770 + $0x34] sm:$0x1]
        %v884 = vld [vmem:[%s770 + $0x38] sm:$0xf]
        %v885 = vld [vmem:[%s770 + $0x3c] sm:$0x1]
        %v887 = vshrl.u32 %v870, 16
        %v889 = vrot.slane %v887, 4
        %v890 = vshll.u32 %v870, 16
        %v892 = vrot.slane %v890, 5
        %v893 = vor.u32 %v889, %v892
        %v894 = vrot.slane %v893, 4
        %v896 = vshll.u32 %v871, 16
        %v898 = vrot.slane %v896, 5
        %v899 = vsel %vm363, %v894, %v898
        %v901 = vshrl.u32 %v872, 16
        %v903 = vrot.slane %v901, 4
        %v904 = vshll.u32 %v872, 16
        %v906 = vrot.slane %v904, 5
        %v907 = vor.u32 %v903, %v906
        %v908 = vrot.slane %v907, 4
        %v910 = vshll.u32 %v873, 16
        %v912 = vrot.slane %v910, 5
        %v913 = vsel %vm363, %v908, %v912
        %v915 = vshrl.u32 %v874, 16
        %v917 = vrot.slane %v915, 4
        %v918 = vshll.u32 %v874, 16
        %v920 = vrot.slane %v918, 5
        %v921 = vor.u32 %v917, %v920
        %v922 = vrot.slane %v921, 4
        %v924 = vshll.u32 %v875, 16
        %v926 = vrot.slane %v924, 5
        %v927 = vsel %vm363, %v922, %v926
        %v929 = vshrl.u32 %v876, 16
        %v931 = vrot.slane %v929, 4
        %v932 = vshll.u32 %v876, 16
        %v934 = vrot.slane %v932, 5
        %v935 = vor.u32 %v931, %v934
        %v936 = vrot.slane %v935, 4
        %v938 = vshll.u32 %v877, 16
        %v940 = vrot.slane %v938, 5
        %v941 = vsel %vm363, %v936, %v940
        %v943 = vshrl.u32 %v878, 16
        %v945 = vrot.slane %v943, 4
        %v946 = vshll.u32 %v878, 16
        %v948 = vrot.slane %v946, 5
        %v949 = vor.u32 %v945, %v948
        %v950 = vrot.slane %v949, 4
        %v952 = vshll.u32 %v879, 16
        %v954 = vrot.slane %v952, 5
        %v955 = vsel %vm363, %v950, %v954
        %v957 = vshrl.u32 %v880, 16
        %v959 = vrot.slane %v957, 4
        %v960 = vshll.u32 %v880, 16
        %v962 = vrot.slane %v960, 5
        %v963 = vor.u32 %v959, %v962
        %v964 = vrot.slane %v963, 4
        %v966 = vshll.u32 %v881, 16
        %v968 = vrot.slane %v966, 5
        %v969 = vsel %vm363, %v964, %v968
        %v971 = vshrl.u32 %v882, 16
        %v973 = vrot.slane %v971, 4
        %v974 = vshll.u32 %v882, 16
        %v976 = vrot.slane %v974, 5
        %v977 = vor.u32 %v973, %v976
        %v978 = vrot.slane %v977, 4
        %v980 = vshll.u32 %v883, 16
        %v982 = vrot.slane %v980, 5
        %v983 = vsel %vm363, %v978, %v982
        %v985 = vshrl.u32 %v884, 16
        %v987 = vrot.slane %v985, 4
        %v988 = vshll.u32 %v884, 16
        %v990 = vrot.slane %v988, 5
        %v991 = vor.u32 %v987, %v990
        %v992 = vrot.slane %v991, 4
        %v994 = vshll.u32 %v885, 16
        %v996 = vrot.slane %v994, 5
        %v997 = vsel %vm363, %v992, %v996
        %1006 = vst.msk [vmem:[#allocation2 + $0x4] sm:$0xf] %vm286, %v899
        %1007 = vst.msk [vmem:[#allocation2 + $0xc] sm:$0xf] %vm286, %v913
        %1008 = vst.msk [vmem:[#allocation2 + $0x14] sm:$0xf] %vm286, %v927
        %1009 = vst.msk [vmem:[#allocation2 + $0x1c] sm:$0xf] %vm286, %v941
        %1010 = vst.msk [vmem:[#allocation2 + $0x24] sm:$0xf] %vm286, %v955
        %1011 = vst.msk [vmem:[#allocation2 + $0x2c] sm:$0xf] %vm286, %v969
        %1012 = vst.msk [vmem:[#allocation2 + $0x34] sm:$0xf] %vm286, %v983
        %1013 = vst.msk [vmem:[#allocation2 + $0x3c] sm:$0xf] %vm286, %v997
        %v1014 = vld [vmem:[#allocation2] sm:$0xff]
        %v1015 = vld [vmem:[#allocation2 + $0x8] sm:$0xff]
        %v1016 = vld [vmem:[#allocation2 + $0x10] sm:$0xff]
        %v1017 = vld [vmem:[#allocation2 + $0x18] sm:$0xff]
        %v1018 = vld [vmem:[#allocation2 + $0x20] sm:$0xff]
        %v1019 = vld [vmem:[#allocation2 + $0x28] sm:$0xff]
        %v1020 = vld [vmem:[#allocation2 + $0x30] sm:$0xff]
        %v1021 = vld [vmem:[#allocation2 + $0x38] sm:$0xff]
        %v1022 = vld [vmem:[%s1] sm:$0xf]
        %v1023 = vld [vmem:[%s1 + $0x4] sm:$0xf]
        %v1024 = vld [vmem:[%s1 + $0x8] sm:$0xf]
        %v1025 = vld [vmem:[%s1 + $0xc] sm:$0xf]
        %v1026 = vld [vmem:[%s1 + $0x10] sm:$0xf]
        %v1027 = vld [vmem:[%s1 + $0x14] sm:$0xf]
        %v1028 = vld [vmem:[%s1 + $0x18] sm:$0xf]
        %v1029 = vld [vmem:[%s1 + $0x1c] sm:$0xf]
        %v1030 = vld [vmem:[%s1 + $0x20] sm:$0xf]
        %v1031 = vld [vmem:[%s1 + $0x24] sm:$0xf]
        %v1032 = vld [vmem:[%s1 + $0x28] sm:$0xf]
        %v1033 = vld [vmem:[%s1 + $0x2c] sm:$0xf]
        %v1034 = vld [vmem:[%s1 + $0x30] sm:$0xf]
        %v1035 = vld [vmem:[%s1 + $0x34] sm:$0xf]
        %v1036 = vld [vmem:[%s1 + $0x38] sm:$0xf]
        %v1037 = vld [vmem:[%s1 + $0x3c] sm:$0xf]
        %v1038 = vld [vmem:[%s1 + $0x40] sm:$0xf]
        %v1039 = vld [vmem:[%s1 + $0x44] sm:$0xf]
        %v1048 = vunpack.c.l.b16 %v1014
        %v1049 = vunpack.c.h.b16 %v1014
        %v1050 = vunpack.c.l.b16 %v1015
        %v1051 = vunpack.c.h.b16 %v1015
        %v1052 = vunpack.c.l.b16 %v1016
        %v1053 = vunpack.c.h.b16 %v1016
        %v1054 = vunpack.c.l.b16 %v1017
        %v1055 = vunpack.c.h.b16 %v1017
        %v1056 = vunpack.c.l.b16 %v1018
        %v1057 = vunpack.c.h.b16 %v1018
        %v1058 = vunpack.c.l.b16 %v1019
        %v1059 = vunpack.c.h.b16 %v1019
        %v1060 = vunpack.c.l.b16 %v1020
        %v1061 = vunpack.c.h.b16 %v1020
        %v1062 = vunpack.c.l.b16 %v1021
        %v1063 = vunpack.c.h.b16 %v1021
        %v1064 = vpack.c.b16 %v1050, %v1048
        %v1065 = vpack.c.b16 %v1051, %v1049
        %v1066 = vpack.c.b16 %v1054, %v1052
        %v1067 = vpack.c.b16 %v1055, %v1053
        %v1068 = vpack.c.b16 %v1058, %v1056
        %v1069 = vpack.c.b16 %v1059, %v1057
        %v1070 = vpack.c.b16 %v1062, %v1060
        %v1071 = vpack.c.b16 %v1063, %v1061
        %v1094 = vunpack.c.l.b16 %v1022
        %v1095 = vunpack.c.l.b16 %v1023
        %v1096 = vunpack.c.l.b16 %v1024
        %v1097 = vunpack.c.l.b16 %v1025
        %v1098 = vunpack.c.l.b16 %v1026
        %v1099 = vunpack.c.l.b16 %v1027
        %v1100 = vunpack.c.l.b16 %v1028
        %v1101 = vunpack.c.l.b16 %v1029
        %v1102 = vunpack.c.l.b16 %v1030
        %v1103 = vunpack.c.l.b16 %v1031
        %v1104 = vunpack.c.l.b16 %v1032
        %v1105 = vunpack.c.l.b16 %v1033
        %v1106 = vunpack.c.l.b16 %v1034
        %v1107 = vunpack.c.l.b16 %v1035
        %v1108 = vunpack.c.l.b16 %v1036
        %v1109 = vunpack.c.l.b16 %v1037
        %v1110 = vunpack.c.l.b16 %v1038
        %v1111 = vunpack.c.l.b16 %v1039
        %v1112 = vpack.c.b16 %v1095, %v1094
        %v1113 = vpack.c.b16 %v1097, %v1096
        %v1114 = vpack.c.b16 %v1099, %v1098
        %v1115 = vpack.c.b16 %v1101, %v1100
        %v1116 = vpack.c.b16 %v1103, %v1102
        %v1117 = vpack.c.b16 %v1105, %v1104
        %v1118 = vpack.c.b16 %v1107, %v1106
        %v1119 = vpack.c.b16 %v1109, %v1108
        %v1120 = vpack.c.b16 %v1111, %v1110
        %vm1130 = vcmask 130048
        %v1132 = vsel %vm1130, %v1065, 0
        %v1135 = vsel %vm1130, %v1067, 0
        %v1138 = vsel %vm1130, %v1069, 0
        %v1141 = vsel %vm1130, %v1071, 0
        %1143 = vmatprep.subr.bf16.mxu0 0
        %1144 = vmatpush1.bf16.msra.mxu0 %v1119
        %1145 = vmatprep.subr.bf16.mxu0 0
        %1146 = vmatpush1.bf16.msra.mxu0 %v1118
        %1147 = vmatprep.subr.bf16.mxu0 0
        %1148 = vmatpush1.bf16.msra.mxu0 %v1117
        %1149 = vmatprep.subr.bf16.mxu0 0
        %1150 = vmatpush1.bf16.msra.mxu0 %v1116
        %1151 = vmatprep.subr.bf16.mxu0 0
        %1152 = vmatpush1.bf16.msra.mxu0 %v1115
        %1153 = vmatprep.subr.bf16.mxu0 0
        %1154 = vmatpush1.bf16.msra.mxu0 %v1114
        %1155 = vmatprep.subr.bf16.mxu0 0
        %1156 = vmatpush1.bf16.msra.mxu0 %v1113
        %1157 = vmatprep.subr.bf16.mxu0 0
        %1158 = vmatpush1.bf16.msra.mxu0 %v1112
        %1159 = vmatprep.subr.bf16.mxu0 0
        %1160 = vmatpush2.bf16.msra.mxu0 0
        %1161 = vmatprep.subr.bf16.mxu0 0
        %1162 = vmatpush2.bf16.msra.mxu0 0
        %1163 = vmatprep.subr.bf16.mxu0 0
        %1164 = vmatpush2.bf16.msra.mxu0 0
        %1165 = vmatprep.subr.bf16.mxu0 0
        %1166 = vmatpush2.bf16.msra.mxu0 0
        %1167 = vmatprep.subr.bf16.mxu0 0
        %1168 = vmatpush2.bf16.msra.mxu0 0
        %1169 = vmatprep.subr.bf16.mxu0 0
        %1170 = vmatpush2.bf16.msra.mxu0 0
        %1171 = vmatprep.subr.bf16.mxu0 0
        %1172 = vmatpush2.bf16.msra.mxu0 0
        %1173 = vmatprep.subr.bf16.mxu0 0
        %1174 = vmatpush2.bf16.msra.mxu0 %v1120
        %1175 = vmatprep.mubr.bf16.mxu0 %v1132
        %1176 = vmatmul.mubr.bf16.gmra.mxu0 %v1064
        %v1177 = vpop.f32.mrf.mxu0
        %v1178 = vadd.f32 0.0, %v1177
        %v1179 = vpop.f32.mrf.mxu0
        %v1180 = vpop.f32.mrf.mxu0
        %v1181 = vadd.f32 0.0, %v1180
        %v1182 = vpop.f32.mrf.mxu0
        %1183 = vmatprep.mubr.bf16.mxu0 %v1135
        %1184 = vmatmul.mubr.bf16.gmra.mxu0 %v1066
        %v1185 = vpop.f32.mrf.mxu0
        %v1186 = vadd.f32 0.0, %v1185
        %v1187 = vpop.f32.mrf.mxu0
        %v1188 = vpop.f32.mrf.mxu0
        %v1189 = vadd.f32 0.0, %v1188
        %v1190 = vpop.f32.mrf.mxu0
        %1191 = vmatprep.mubr.bf16.mxu0 %v1138
        %1192 = vmatmul.mubr.bf16.gmra.mxu0 %v1068
        %v1193 = vpop.f32.mrf.mxu0
        %v1194 = vadd.f32 0.0, %v1193
        %v1195 = vpop.f32.mrf.mxu0
        %v1196 = vpop.f32.mrf.mxu0
        %v1197 = vadd.f32 0.0, %v1196
        %v1198 = vpop.f32.mrf.mxu0
        %1199 = vmatprep.mubr.bf16.mxu0 %v1141
        %1200 = vmatmul.mubr.bf16.gmra.mxu0 %v1070
        %v1201 = vpop.f32.mrf.mxu0
        %v1202 = vadd.f32 0.0, %v1201
        %v1203 = vpop.f32.mrf.mxu0
        %v1204 = vpop.f32.mrf.mxu0
        %v1205 = vadd.f32 0.0, %v1204
        %v1206 = vpop.f32.mrf.mxu0
        %1207 = vdwg.mxu0
        %v1208 = vld [vmem:[%s3] sm:$0x1]
        %v1210 = vlaneseq
        %v1211 = vshrl.u32 %v1210, 7
        %v1212 = vsub.s32 0, %v1211
        %v1213 = vrot.slane %v1208, %v1212
        %v1215 = vmul.f32 %v1178, %v1213
        %v1216 = vmul.f32 %v1181, %v1213
        %v1217 = vmul.f32 %v1186, %v1213
        %v1218 = vmul.f32 %v1189, %v1213
        %v1219 = vmul.f32 %v1194, %v1213
        %v1220 = vmul.f32 %v1197, %v1213
        %v1221 = vmul.f32 %v1202, %v1213
        %v1222 = vmul.f32 %v1205, %v1213
        %v1223 = vld [vmem:[%s4] sm:$0x1]
        %v1225 = vlaneseq
        %v1226 = vshrl.u32 %v1225, 7
        %v1227 = vsub.s32 0, %v1226
        %v1228 = vrot.slane %v1223, %v1227
        %v1230 = vadd.f32 %v1215, %v1228
        %v1231 = vadd.f32 %v1216, %v1228
        %v1232 = vadd.f32 %v1217, %v1228
        %v1233 = vadd.f32 %v1218, %v1228
        %v1234 = vadd.f32 %v1219, %v1228
        %v1235 = vadd.f32 %v1220, %v1228
        %v1236 = vadd.f32 %v1221, %v1228
        %v1237 = vadd.f32 %v1222, %v1228
        %v1238 = vmax.f32 %v1230, 0.0
        %v1239 = vmax.f32 %v1231, 0.0
        %v1240 = vmax.f32 %v1232, 0.0
        %v1241 = vmax.f32 %v1233, 0.0
        %v1242 = vmax.f32 %v1234, 0.0
        %v1243 = vmax.f32 %v1235, 0.0
        %v1244 = vmax.f32 %v1236, 0.0
        %v1245 = vmax.f32 %v1237, 0.0
        %v1246 = vpack.c.bf16 %v1239, %v1238
        %v1247 = vpack.c.bf16 %v1241, %v1240
        %v1248 = vpack.c.bf16 %v1243, %v1242
        %v1249 = vpack.c.bf16 %v1245, %v1244
        %v1250 = vld [vmem:[%s2] sm:$0xf]
        %v1251 = vld [vmem:[%s2 + $0x4] sm:$0xf]
        %v1252 = vld [vmem:[%s2 + $0x8] sm:$0xf]
        %v1253 = vld [vmem:[%s2 + $0xc] sm:$0xf]
        %v1258 = vunpack.c.l.b16 %v1250
        %v1259 = vunpack.c.l.b16 %v1251
        %v1260 = vunpack.c.l.b16 %v1252
        %v1261 = vunpack.c.l.b16 %v1253
        %v1262 = vpack.c.b16 %v1259, %v1258
        %v1263 = vpack.c.b16 %v1261, %v1260
        %vm1266 = vcmask 261120
        %v1268 = vsel %vm1266, %v1246, 0
        %v1271 = vsel %vm1266, %v1247, 0
        %v1274 = vsel %vm1266, %v1248, 0
        %v1277 = vsel %vm1266, %v1249, 0
        %1279 = vmatprep.subr.bf16.mxu0 0
        %1280 = vmatpush1.bf16.msra.mxu0 0
        %1281 = vmatprep.subr.bf16.mxu0 0
        %1282 = vmatpush1.bf16.msra.mxu0 0
        %1283 = vmatprep.subr.bf16.mxu0 0
        %1284 = vmatpush1.bf16.msra.mxu0 0
        %1285 = vmatprep.subr.bf16.mxu0 0
        %1286 = vmatpush1.bf16.msra.mxu0 0
        %1287 = vmatprep.subr.bf16.mxu0 0
        %1288 = vmatpush1.bf16.msra.mxu0 0
        %1289 = vmatprep.subr.bf16.mxu0 0
        %1290 = vmatpush1.bf16.msra.mxu0 0
        %1291 = vmatprep.subr.bf16.mxu0 0
        %1292 = vmatpush1.bf16.msra.mxu0 %v1263
        %1293 = vmatprep.subr.bf16.mxu0 0
        %1294 = vmatpush1.bf16.msra.mxu0 %v1262
        %1295 = vmatprep.subr.bf16.mxu0 0
        %1296 = vmatpush2.bf16.msra.mxu0 0
        %1297 = vmatprep.subr.bf16.mxu0 0
        %1298 = vmatpush2.bf16.msra.mxu0 0
        %1299 = vmatprep.subr.bf16.mxu0 0
        %1300 = vmatpush2.bf16.msra.mxu0 0
        %1301 = vmatprep.subr.bf16.mxu0 0
        %1302 = vmatpush2.bf16.msra.mxu0 0
        %1303 = vmatprep.subr.bf16.mxu0 0
        %1304 = vmatpush2.bf16.msra.mxu0 0
        %1305 = vmatprep.subr.bf16.mxu0 0
        %1306 = vmatpush2.bf16.msra.mxu0 0
        %1307 = vmatprep.subr.bf16.mxu0 0
        %1308 = vmatpush2.bf16.msra.mxu0 0
        %1309 = vmatprep.subr.bf16.mxu0 0
        %1310 = vmatpush2.bf16.msra.mxu0 0
        %1311 = vmatprep.mubr.bf16.mxu0 0
        %1312 = vmatmul.mubr.bf16.gmra.mxu0 %v1268
        %v1313 = vpop.f32.mrf.mxu0
        %v1314 = vadd.f32 0.0, %v1313
        %v1315 = vpop.f32.mrf.mxu0
        %v1316 = vpop.f32.mrf.mxu0
        %v1317 = vadd.f32 0.0, %v1316
        %v1318 = vpop.f32.mrf.mxu0
        %1319 = vmatprep.mubr.bf16.mxu0 0
        %1320 = vmatmul.mubr.bf16.gmra.mxu0 %v1271
        %v1321 = vpop.f32.mrf.mxu0
        %v1322 = vadd.f32 0.0, %v1321
        %v1323 = vpop.f32.mrf.mxu0
        %v1324 = vpop.f32.mrf.mxu0
        %v1325 = vadd.f32 0.0, %v1324
        %v1326 = vpop.f32.mrf.mxu0
        %1327 = vmatprep.mubr.bf16.mxu0 0
        %1328 = vmatmul.mubr.bf16.gmra.mxu0 %v1274
        %v1329 = vpop.f32.mrf.mxu0
        %v1330 = vadd.f32 0.0, %v1329
        %v1331 = vpop.f32.mrf.mxu0
        %v1332 = vpop.f32.mrf.mxu0
        %v1333 = vadd.f32 0.0, %v1332
        %v1334 = vpop.f32.mrf.mxu0
        %1335 = vmatprep.mubr.bf16.mxu0 0
        %1336 = vmatmul.mubr.bf16.gmra.mxu0 %v1277
        %v1337 = vpop.f32.mrf.mxu0
        %v1338 = vadd.f32 0.0, %v1337
        %v1339 = vpop.f32.mrf.mxu0
        %v1340 = vpop.f32.mrf.mxu0
        %v1341 = vadd.f32 0.0, %v1340
        %v1342 = vpop.f32.mrf.mxu0
        %1343 = vdwg.mxu0
        %v1344 = vld [vmem:[%s5] sm:$0x1]
        %v1346 = vlaneseq
        %v1347 = vshrl.u32 %v1346, 7
        %v1348 = vsub.s32 0, %v1347
        %v1349 = vrot.slane %v1344, %v1348
        %v1351 = vmul.f32 %v1314, %v1349
        %v1352 = vmul.f32 %v1317, %v1349
        %v1353 = vmul.f32 %v1322, %v1349
        %v1354 = vmul.f32 %v1325, %v1349
        %v1355 = vmul.f32 %v1330, %v1349
        %v1356 = vmul.f32 %v1333, %v1349
        %v1357 = vmul.f32 %v1338, %v1349
        %v1358 = vmul.f32 %v1341, %v1349
        %v1359 = vld [vmem:[%s6] sm:$0x1]
        %v1361 = vlaneseq
        %v1362 = vshrl.u32 %v1361, 7
        %v1363 = vsub.s32 0, %v1362
        %v1364 = vrot.slane %v1359, %v1363
        %v1366 = vadd.f32 %v1351, %v1364
        %v1367 = vadd.f32 %v1352, %v1364
        %v1368 = vadd.f32 %v1353, %v1364
        %v1369 = vadd.f32 %v1354, %v1364
        %v1370 = vadd.f32 %v1355, %v1364
        %v1371 = vadd.f32 %v1356, %v1364
        %v1372 = vadd.f32 %v1357, %v1364
        %v1373 = vadd.f32 %v1358, %v1364
        %1374 = vst.msk [vmem:[%s271] sm:$0xff] %vm1266, %v1366
        %1375 = vst.msk [vmem:[%s271 + $0x8] sm:$0xff] %vm1266, %v1367
        %1376 = vst.msk [vmem:[%s271 + $0x10] sm:$0xff] %vm1266, %v1368
        %1377 = vst.msk [vmem:[%s271 + $0x18] sm:$0xff] %vm1266, %v1369
        %1378 = vst.msk [vmem:[%s271 + $0x20] sm:$0xff] %vm1266, %v1370
        %1379 = vst.msk [vmem:[%s271 + $0x28] sm:$0xff] %vm1266, %v1371
        %1380 = vst.msk [vmem:[%s271 + $0x30] sm:$0xff] %vm1266, %v1372
        %1381 = vst.msk [vmem:[%s271 + $0x38] sm:$0xff] %vm1266, %v1373
        %s1382 = sand.u32 %s181, 1
        %s1383 = scalar_lea.sflag [#allocation4], %s1382
        %s1384 = sand.u32 %s181, 1
        %s1385 = smul.addr %s1384, 64
        %s1386 = scalar_lea.vmem [#allocation3], %s1385
        // Predicated region
        $region49: #{down_sample_forward.1} parent=47 // pred_check
          %p1387 = pneg %p191
        $region50: #{down_sample_forward.1} parent=47 // pred_check_branch
          %1389 = sbr.rel (%p1387) target = $region52
        $region51: #{down_sample_forward.1} parent=47 // pred_region
          %s1391 = ssub.s32 1024, 1024
          %1392 = vsyncadd %s1383, %s1391
          %s1393 = smul.addr %s21, 8
          %s1394 = smul.addr %s1393, 128
          %s1395 = scalar_lea.hbm %s7, %s1394
          %s1396 = sshll.u32 %s1386, 4
          %s1397 = int_to_ptr.vmem [resolvable:$true] %s1396
          %1402 = dma.vmem_to_hbm [thread:$0]  %s1397, 1024, %s1395, %s1383, 128, 128, 8
        $region52: #{down_sample_forward.1} parent=47 // pred_fallthru
          _
      $region48: #{down_sample_forward.1} parent=5 // pred_fallthru
        _
      %p1403 = scmp.le.s32.totalorder 2, %s16
      // Predicated region
      $region53: #{down_sample_forward.1} parent=5 // pred_check
        %p1404 = pneg %p1403
      $region54: #{down_sample_forward.1} parent=5 // pred_check_branch
        %1406 = sbr.rel (%p1404) target = $region56
      $region55: #{down_sample_forward.1} parent=5 // pred_region
        %s1407 = ssub.s32 %s16, 2
        // Predicated region
        $region57: #{down_sample_forward.1} parent=55 // pred_check
          %p1408 = pneg %p197
        $region58: #{down_sample_forward.1} parent=55 // pred_check_branch
          %1410 = sbr.rel (%p1408) target = $region60
        $region59: #{down_sample_forward.1} parent=55 // pred_region
          %s1411 = sand.u32 %s182, 1
          %s1412 = scalar_lea.sflag [#allocation4], %s1411
          %s1413 = sand.u32 %s182, 1
          %s1414 = smul.addr %s1413, 64
          %s1415 = scalar_lea.vmem [#allocation3], %s1414
          %1416 = dma.done %s1412, 1024
        $region60: #{down_sample_forward.1} parent=55 // pred_fallthru
          _
      $region56: #{down_sample_forward.1} parent=5 // pred_fallthru
        _
    $region6: #{down_sample_forward.1} parent=1 // loop_footer
      %s20 = sadd.s32 1, %s16
    $region7: #{down_sample_forward.1} parent=1 // loop_footer_branch
      %15 = sbr.rel target = $region3
    $region8: #{down_sample_forward.1} parent=1 // loop_exit
      _
    %1417 = vsyncpa [#allocation4], 1
    %s1418 = scalar_lea.sflag [#allocation4], 1
    %1419 = vsyncpa %s1418, 1

</llo_original>
